<compile_context>
chip_gen: v5e
topology: v5e:2x2
jax: 0.10.0
libtpu: 0.0.40
codegen_flags: <defaults>
</compile_context>

<pallas_src>
import functools
import math

import jax
import jax.numpy as jnp
from jax.experimental import pallas as pl
from jax.experimental.pallas import tpu as pltpu


# ----------------------------------------------------------------------------
# Fused kernel: all LSTM layers + timesteps + classifier head.
# ----------------------------------------------------------------------------
def _fused_lstm_kernel(*refs, num_layers, seq_len, batch, hidden):
    """refs layout:
      [x (S*B, I) f32]
      + [w_ih_t (in_l, 4H) bf16, w_hh_t (H, 4H) bf16, bias (1, 4H) f32] * num_layers
      + [fc_w_t (H, O) f32, fc_b (1, O) f32]
      + [out (S, O) f32]
      + scratch: xproj (S*B, 4H) f32, slab (S*B, H) f32, h (B, H) f32, c (B, H) f32,
                 last (S, H) f32
    """
    x_ref = refs[0]
    layer_refs = refs[1:1 + 3 * num_layers]
    fc_w_ref = refs[1 + 3 * num_layers]
    fc_b_ref = refs[2 + 3 * num_layers]
    out_ref = refs[3 + 3 * num_layers]
    xproj_scr, slab_scr, h_scr, c_scr, last_scr = refs[4 + 3 * num_layers:]

    for l in range(num_layers):            # static unroll over layers (weights resident)
        wih = layer_refs[3 * l][...]       # (in_l, 4H)  bf16
        whh = layer_refs[3 * l + 1][...]   # (H, 4H)     bf16
        bias = layer_refs[3 * l + 2][...]  # (1, 4H)     f32

        if l == 0:
            layer_in = x_ref[...].astype(jnp.bfloat16)       # (S*B, I)
        else:
            layer_in = slab_scr[...].astype(jnp.bfloat16)    # (S*B, H)

        # Hoisted input projection: ONE matmul over all timesteps, bias folded in.
        xproj_scr[...] = (
            jnp.dot(layer_in, wih, preferred_element_type=jnp.float32) + bias
        )

        h_scr[...] = jnp.zeros_like(h_scr)
        c_scr[...] = jnp.zeros_like(c_scr)

        is_last_layer = l == num_layers - 1

        @pl.loop(0, seq_len, unroll=True)
        def _(t):
            row = pl.multiple_of(t * batch, batch)
            h = h_scr[...]                                   # (B, H) f32
            c = c_scr[...]                                   # (B, H) f32
            # Only the recurrent matmul remains inside the time loop.
            gates = xproj_scr[pl.ds(row, batch), :] + jnp.dot(
                h.astype(jnp.bfloat16), whh, preferred_element_type=jnp.float32)
            # PyTorch gate order [i, f, g, o].  (For production H >= 128 these static
            # slices land on clean lane boundaries; at H=32 they sit inside one vreg.)
            i_g = jax.nn.sigmoid(gates[:, 0 * hidden:1 * hidden])
            f_g = jax.nn.sigmoid(gates[:, 1 * hidden:2 * hidden])
            g_g = jnp.tanh(gates[:, 2 * hidden:3 * hidden])
            o_g = jax.nn.sigmoid(gates[:, 3 * hidden:4 * hidden])
            c_new = f_g * c + i_g * g_g
            h_new = o_g * jnp.tanh(c_new)
            h_scr[...] = h_new
            c_scr[...] = c_new
            if is_last_layer:
                # The head consumes x[:, -1, :]: last *batch* element at each timestep
                # (faithful to the PyTorch module).
                last_scr[pl.ds(t, 1), :] = h_new[batch - 1:batch, :]
            else:
                slab_scr[pl.ds(row, batch), :] = h_new

    # Classifier head: Dropout (identity at eval) -> Linear -> Sigmoid, in f32.
    # TODO(synk): training-mode stochastic dropout is not applied (eval semantics).
    logits = (
        jnp.dot(last_scr[...], fc_w_ref[...], preferred_element_type=jnp.float32)
        + fc_b_ref[...]
    )
    out_ref[...] = jax.nn.sigmoid(logits).astype(out_ref.dtype)


# ----------------------------------------------------------------------------
# Wrapper
# ----------------------------------------------------------------------------
def lstm_module_forward(inputs, prepped):
    """inputs: (S, B, I) f32.  Returns (S, O) f32 — mirrors the PyTorch forward."""
    S, B, I = inputs.shape
    H, O = prepped["fc_w_t"].shape
    L = len(prepped["layers"])

    x2 = inputs.reshape(S * B, I)           # timestep-major flat activation slab

    args = [x2]
    for lp in prepped["layers"]:
        args.extend([lp["w_ih_t"], lp["w_hh_t"], lp["bias"]])
    args.extend([prepped["fc_w_t"], prepped["fc_b"]])

    scratch_shapes = [
        pltpu.VMEM((S * B, 4 * H), jnp.float32),   # hoisted x @ W_ih (+bias)
        pltpu.VMEM((S * B, H), jnp.float32),       # inter-layer activation slab
        pltpu.VMEM((B, H), jnp.float32),           # h state
        pltpu.VMEM((B, H), jnp.float32),           # c state
        pltpu.VMEM((S, H), jnp.float32),           # last-batch-element h sequence
    ]

    # All-weights-resident fused path: cheap VMEM budget sanity check.
    # TODO(synk): for large H (especially v7x's 64 MiB VMEM), fall back to streaming
    #             W_hh in double-buffered tiles over the 4H axis instead of residency,
    #             and consider dual-TensorCore layer pipelining via pl.core_map.
    in_bytes = sum(math.prod(a.shape) * jnp.dtype(a.dtype).itemsize for a in args)
    scr_bytes = 4 * (S * B * 4 * H + S * B * H + 2 * B * H + S * H)
    assert in_bytes + scr_bytes < 32 * 1024 * 1024, "fused LSTM kernel exceeds VMEM budget"

    kernel = functools.partial(
        _fused_lstm_kernel, num_layers=L, seq_len=S, batch=B, hidden=H)

    return pl.pallas_call(
        kernel,
        out_shape=jax.ShapeDtypeStruct((S, O), jnp.float32),
        scratch_shapes=scratch_shapes,
    )(*args)


# ----------------------------------------------------------------------------
# Parameters
# ----------------------------------------------------------------------------
def init_params(key, layer_num, input_size, hidden, output_size):
    """PyTorch-layout params: U(-1/sqrt(H), 1/sqrt(H))."""
    bound = 1.0 / jnp.sqrt(jnp.float32(hidden))
    layers = []
    for l in range(layer_num):
        in_sz = input_size if l == 0 else hidden
        key, k1, k2, k3, k4 = jax.random.split(key, 5)
        layers.append(dict(
            w_ih=jax.random.uniform(k1, (4 * hidden, in_sz), jnp.float32, -bound, bound),
            w_hh=jax.random.uniform(k2, (4 * hidden, hidden), jnp.float32, -bound, bound),
            b_ih=jax.random.uniform(k3, (4 * hidden,), jnp.float32, -bound, bound),
            b_hh=jax.random.uniform(k4, (4 * hidden,), jnp.float32, -bound, bound),
        ))
    key, k1, k2 = jax.random.split(key, 3)
    fc_w = jax.random.uniform(k1, (output_size, hidden), jnp.float32, -bound, bound)
    fc_b = jax.random.uniform(k2, (output_size,), jnp.float32, -bound, bound)
    return dict(lstm_layers=layers, fc_w=fc_w, fc_b=fc_b)


def prepare_params(params):
    """One-time conversion to kernel-ready layouts (pre-transposed, bias-fused, bf16
    MXU operands) so no transpose/cast work sits on the per-call path."""
    layers = []
    for p in params["lstm_layers"]:
        layers.append(dict(
            w_ih_t=jnp.transpose(p["w_ih"]).astype(jnp.bfloat16),   # (in, 4H)
            w_hh_t=jnp.transpose(p["w_hh"]).astype(jnp.bfloat16),   # (H, 4H)
            bias=(p["b_ih"] + p["b_hh"]).reshape(1, -1).astype(jnp.float32),
        ))
    return dict(
        layers=layers,
        fc_w_t=jnp.transpose(params["fc_w"]).astype(jnp.float32),   # (H, O)
        fc_b=params["fc_b"].reshape(1, -1).astype(jnp.float32),     # (1, O)
    )


# ----------------------------------------------------------------------------
# Pure-JAX reference (f32, PyTorch semantics) for correctness check
# ----------------------------------------------------------------------------
def reference_forward(inputs, params):
    x = inputs
    for p in params["lstm_layers"]:
        S, B, _ = x.shape
        H = p["w_hh"].shape[1]
        h = jnp.zeros((B, H), jnp.float32)
        c = jnp.zeros((B, H), jnp.float32)
        outs = []
        for t in range(S):
            gates = x[t] @ p["w_ih"].T + h @ p["w_hh"].T + p["b_ih"] + p["b_hh"]
            i_g = jax.nn.sigmoid(gates[:, 0 * H:1 * H])
            f_g = jax.nn.sigmoid(gates[:, 1 * H:2 * H])
            g_g = jnp.tanh(gates[:, 2 * H:3 * H])
            o_g = jax.nn.sigmoid(gates[:, 3 * H:4 * H])
            c = f_g * c + i_g * g_g
            h = o_g * jnp.tanh(c)
            outs.append(h)
        x = jnp.stack(outs, axis=0)
    x = x[:, -1, :]
    return jax.nn.sigmoid(x @ params["fc_w"].T + params["fc_b"])


if __name__ == "__main__":
    LAYER_NUM = 2
    INPUT_SIZE = 4
    HIDDEN = 32
    OUTPUT_SIZE = 2
    SEQ = 8
    BATCH = 2

    key = jax.random.PRNGKey(0)
    key, k_in = jax.random.split(key)
    inputs = jax.random.normal(k_in, (SEQ, BATCH, INPUT_SIZE), jnp.float32)
    params = init_params(key, LAYER_NUM, INPUT_SIZE, HIDDEN, OUTPUT_SIZE)
    prepped = prepare_params(params)      # one-time: pre-transpose / fuse bias / bf16 cast

    fwd = jax.jit(lstm_module_forward)
    out = jax.block_until_ready(fwd(inputs, prepped))

    ref = reference_forward(inputs, params)
    assert out.shape == (SEQ, OUTPUT_SIZE), out.shape
    # Tolerance covers bf16 MXU feed (f32 accumulation, f32 elementwise math).
    assert jnp.allclose(out, ref, rtol=2e-2, atol=2e-2), (
        f"mismatch vs reference: max abs err {jnp.max(jnp.abs(out - ref))}")

    print("KERNEL_OK")
</pallas_src>

<mosaic_0001>
module attributes {stable_mosaic.version = 11 : i64} {
  func.func @_fused_lstm_kernel(%arg0: memref<16x4xf32, #tpu.memory_space<vmem>>, %arg1: memref<4x128xbf16, #tpu.memory_space<vmem>>, %arg2: memref<32x128xbf16, #tpu.memory_space<vmem>>, %arg3: memref<1x128xf32, #tpu.memory_space<vmem>>, %arg4: memref<32x128xbf16, #tpu.memory_space<vmem>>, %arg5: memref<32x128xbf16, #tpu.memory_space<vmem>>, %arg6: memref<1x128xf32, #tpu.memory_space<vmem>>, %arg7: memref<32x2xf32, #tpu.memory_space<vmem>>, %arg8: memref<1x2xf32, #tpu.memory_space<vmem>>, %arg9: memref<8x2xf32, #tpu.memory_space<vmem>>, %arg10: memref<16x128xf32, #tpu.memory_space<vmem>>, %arg11: memref<16x32xf32, #tpu.memory_space<vmem>>, %arg12: memref<2x32xf32, #tpu.memory_space<vmem>>, %arg13: memref<2x32xf32, #tpu.memory_space<vmem>>, %arg14: memref<8x32xf32, #tpu.memory_space<vmem>>) attributes {dimension_semantics = [], scalar_prefetch = 0 : i64, scratch_operands = 5 : i64, tpu.core_type = #tpu.core_type<tc>} {
    %c0 = arith.constant 0 : index
    %c0_0 = arith.constant 0 : index
    %0 = vector.load %arg1[%c0, %c0_0] : memref<4x128xbf16, #tpu.memory_space<vmem>>, vector<4x128xbf16>
    %c0_1 = arith.constant 0 : index
    %c0_2 = arith.constant 0 : index
    %1 = vector.load %arg2[%c0_1, %c0_2] : memref<32x128xbf16, #tpu.memory_space<vmem>>, vector<32x128xbf16>
    %c0_3 = arith.constant 0 : index
    %c0_4 = arith.constant 0 : index
    %2 = vector.load %arg3[%c0_3, %c0_4] : memref<1x128xf32, #tpu.memory_space<vmem>>, vector<1x128xf32>
    %c0_5 = arith.constant 0 : index
    %c0_6 = arith.constant 0 : index
    %3 = vector.load %arg0[%c0_5, %c0_6] : memref<16x4xf32, #tpu.memory_space<vmem>>, vector<16x4xf32>
    %4 = arith.truncf %3 : vector<16x4xf32> to vector<16x4xbf16>
    %cst = arith.constant dense<0.000000e+00> : vector<16x128xf32>
    %5 = tpu.matmul %4, %0, %cst {dimension_numbers = #tpu.dot_dimension_numbers<[1], [0], [0], [1], [0, 0, 1, 1], [], []>} : vector<16x4xbf16>, vector<4x128xbf16>, vector<16x128xf32> -> vector<16x128xf32>
    %6 = vector.broadcast %2 : vector<1x128xf32> to vector<16x128xf32>
    %7 = arith.addf %5, %6 : vector<16x128xf32>
    %c0_7 = arith.constant 0 : index
    %c0_8 = arith.constant 0 : index
    %8 = vector.load %arg10[%c0_7, %c0_8] : memref<16x128xf32, #tpu.memory_space<vmem>>, vector<16x128xf32>
    tpu.vector_store %arg10[%c0_7, %c0_8], %7 {strides = array<i32>} : memref<16x128xf32, #tpu.memory_space<vmem>>, vector<16x128xf32>,
    %cst_9 = arith.constant 0.000000e+00 : f32
    %9 = vector.broadcast %cst_9 : f32 to vector<2x32xf32>
    %c0_10 = arith.constant 0 : index
    %c0_11 = arith.constant 0 : index
    %10 = vector.load %arg12[%c0_10, %c0_11] : memref<2x32xf32, #tpu.memory_space<vmem>>, vector<2x32xf32>
    tpu.vector_store %arg12[%c0_10, %c0_11], %9 {strides = array<i32>} : memref<2x32xf32, #tpu.memory_space<vmem>>, vector<2x32xf32>,
    %cst_12 = arith.constant 0.000000e+00 : f32
    %11 = vector.broadcast %cst_12 : f32 to vector<2x32xf32>
    %c0_13 = arith.constant 0 : index
    %c0_14 = arith.constant 0 : index
    %12 = vector.load %arg13[%c0_13, %c0_14] : memref<2x32xf32, #tpu.memory_space<vmem>>, vector<2x32xf32>
    tpu.vector_store %arg13[%c0_13, %c0_14], %11 {strides = array<i32>} : memref<2x32xf32, #tpu.memory_space<vmem>>, vector<2x32xf32>,
    %c0_i32 = arith.constant 0 : i32
    %c1_i32 = arith.constant 1 : i32
    %13 = arith.muli %c0_i32, %c1_i32 : i32
    %c0_i32_15 = arith.constant 0 : i32
    %14 = arith.addi %c0_i32_15, %13 : i32
    %c2_i32 = arith.constant 2 : i32
    %15 = arith.muli %14, %c2_i32 : i32
    %16 = tpu.assume_multiple %15, 2 : i32
    %c0_16 = arith.constant 0 : index
    %c0_17 = arith.constant 0 : index
    %17 = vector.load %arg12[%c0_16, %c0_17] : memref<2x32xf32, #tpu.memory_space<vmem>>, vector<2x32xf32>
    %c0_18 = arith.constant 0 : index
    %c0_19 = arith.constant 0 : index
    %18 = vector.load %arg13[%c0_18, %c0_19] : memref<2x32xf32, #tpu.memory_space<vmem>>, vector<2x32xf32>
    %19 = arith.index_cast %16 : i32 to index
    %c0_20 = arith.constant 0 : index
    %20 = vector.load %arg10[%19, %c0_20] : memref<16x128xf32, #tpu.memory_space<vmem>>, vector<2x128xf32>
    %21 = arith.truncf %17 : vector<2x32xf32> to vector<2x32xbf16>
    %cst_21 = arith.constant dense<0.000000e+00> : vector<2x128xf32>
    %22 = tpu.matmul %21, %1, %cst_21 {dimension_numbers = #tpu.dot_dimension_numbers<[1], [0], [0], [1], [0, 0, 1, 1], [], []>} : vector<2x32xbf16>, vector<32x128xbf16>, vector<2x128xf32> -> vector<2x128xf32>
    %23 = arith.addf %20, %22 : vector<2x128xf32>
    %24 = vector.extract_strided_slice %23 {offsets = [0, 0], sizes = [2, 32], strides = [1, 1]} : vector<2x128xf32> to vector<2x32xf32>
    %25 = arith.negf %24 : vector<2x32xf32>
    %26 = math.exp %25 : vector<2x32xf32>
    %cst_22 = arith.constant 1.000000e+00 : f32
    %27 = vector.broadcast %cst_22 : f32 to vector<2x32xf32>
    %28 = arith.addf %27, %26 : vector<2x32xf32>
    %29 = arith.divf %27, %28 : vector<2x32xf32>
    %30 = vector.extract_strided_slice %23 {offsets = [0, 32], sizes = [2, 32], strides = [1, 1]} : vector<2x128xf32> to vector<2x32xf32>
    %31 = arith.negf %30 : vector<2x32xf32>
    %32 = math.exp %31 : vector<2x32xf32>
    %cst_23 = arith.constant 1.000000e+00 : f32
    %33 = vector.broadcast %cst_23 : f32 to vector<2x32xf32>
    %34 = arith.addf %33, %32 : vector<2x32xf32>
    %35 = arith.divf %33, %34 : vector<2x32xf32>
    %36 = vector.extract_strided_slice %23 {offsets = [0, 64], sizes = [2, 32], strides = [1, 1]} : vector<2x128xf32> to vector<2x32xf32>
    %37 = math.tanh %36 : vector<2x32xf32>
    %38 = vector.extract_strided_slice %23 {offsets = [0, 96], sizes = [2, 32], strides = [1, 1]} : vector<2x128xf32> to vector<2x32xf32>
    %39 = arith.negf %38 : vector<2x32xf32>
    %40 = math.exp %39 : vector<2x32xf32>
    %cst_24 = arith.constant 1.000000e+00 : f32
    %41 = vector.broadcast %cst_24 : f32 to vector<2x32xf32>
    %42 = arith.addf %41, %40 : vector<2x32xf32>
    %43 = arith.divf %41, %42 : vector<2x32xf32>
    %44 = arith.mulf %35, %18 : vector<2x32xf32>
    %45 = arith.mulf %29, %37 : vector<2x32xf32>
    %46 = arith.addf %44, %45 : vector<2x32xf32>
    %47 = math.tanh %46 : vector<2x32xf32>
    %48 = arith.mulf %43, %47 : vector<2x32xf32>
    %c0_25 = arith.constant 0 : index
    %c0_26 = arith.constant 0 : index
    %49 = vector.load %arg12[%c0_25, %c0_26] : memref<2x32xf32, #tpu.memory_space<vmem>>, vector<2x32xf32>
    tpu.vector_store %arg12[%c0_25, %c0_26], %48 {strides = array<i32>} : memref<2x32xf32, #tpu.memory_space<vmem>>, vector<2x32xf32>,
    %c0_27 = arith.constant 0 : index
    %c0_28 = arith.constant 0 : index
    %50 = vector.load %arg13[%c0_27, %c0_28] : memref<2x32xf32, #tpu.memory_space<vmem>>, vector<2x32xf32>
    tpu.vector_store %arg13[%c0_27, %c0_28], %46 {strides = array<i32>} : memref<2x32xf32, #tpu.memory_space<vmem>>, vector<2x32xf32>,
    %51 = arith.index_cast %16 : i32 to index
    %c0_29 = arith.constant 0 : index
    %52 = vector.load %arg11[%51, %c0_29] : memref<16x32xf32, #tpu.memory_space<vmem>>, vector<2x32xf32>
    tpu.vector_store %arg11[%51, %c0_29], %48 {strides = array<i32>} : memref<16x32xf32, #tpu.memory_space<vmem>>, vector<2x32xf32>,
    %c1_i32_30 = arith.constant 1 : i32
    %c1_i32_31 = arith.constant 1 : i32
    %53 = arith.muli %c1_i32_30, %c1_i32_31 : i32
    %c0_i32_32 = arith.constant 0 : i32
    %54 = arith.addi %c0_i32_32, %53 : i32
    %c2_i32_33 = arith.constant 2 : i32
    %55 = arith.muli %54, %c2_i32_33 : i32
    %56 = tpu.assume_multiple %55, 2 : i32
    %c0_34 = arith.constant 0 : index
    %c0_35 = arith.constant 0 : index
    %57 = vector.load %arg12[%c0_34, %c0_35] : memref<2x32xf32, #tpu.memory_space<vmem>>, vector<2x32xf32>
    %c0_36 = arith.constant 0 : index
    %c0_37 = arith.constant 0 : index
    %58 = vector.load %arg13[%c0_36, %c0_37] : memref<2x32xf32, #tpu.memory_space<vmem>>, vector<2x32xf32>
    %59 = arith.index_cast %56 : i32 to index
    %c0_38 = arith.constant 0 : index
    %60 = vector.load %arg10[%59, %c0_38] : memref<16x128xf32, #tpu.memory_space<vmem>>, vector<2x128xf32>
    %61 = arith.truncf %57 : vector<2x32xf32> to vector<2x32xbf16>
    %cst_39 = arith.constant dense<0.000000e+00> : vector<2x128xf32>
    %62 = tpu.matmul %61, %1, %cst_39 {dimension_numbers = #tpu.dot_dimension_numbers<[1], [0], [0], [1], [0, 0, 1, 1], [], []>} : vector<2x32xbf16>, vector<32x128xbf16>, vector<2x128xf32> -> vector<2x128xf32>
    %63 = arith.addf %60, %62 : vector<2x128xf32>
    %64 = vector.extract_strided_slice %63 {offsets = [0, 0], sizes = [2, 32], strides = [1, 1]} : vector<2x128xf32> to vector<2x32xf32>
    %65 = arith.negf %64 : vector<2x32xf32>
    %66 = math.exp %65 : vector<2x32xf32>
    %cst_40 = arith.constant 1.000000e+00 : f32
    %67 = vector.broadcast %cst_40 : f32 to vector<2x32xf32>
    %68 = arith.addf %67, %66 : vector<2x32xf32>
    %69 = arith.divf %67, %68 : vector<2x32xf32>
    %70 = vector.extract_strided_slice %63 {offsets = [0, 32], sizes = [2, 32], strides = [1, 1]} : vector<2x128xf32> to vector<2x32xf32>
    %71 = arith.negf %70 : vector<2x32xf32>
    %72 = math.exp %71 : vector<2x32xf32>
    %cst_41 = arith.constant 1.000000e+00 : f32
    %73 = vector.broadcast %cst_41 : f32 to vector<2x32xf32>
    %74 = arith.addf %73, %72 : vector<2x32xf32>
    %75 = arith.divf %73, %74 : vector<2x32xf32>
    %76 = vector.extract_strided_slice %63 {offsets = [0, 64], sizes = [2, 32], strides = [1, 1]} : vector<2x128xf32> to vector<2x32xf32>
    %77 = math.tanh %76 : vector<2x32xf32>
    %78 = vector.extract_strided_slice %63 {offsets = [0, 96], sizes = [2, 32], strides = [1, 1]} : vector<2x128xf32> to vector<2x32xf32>
    %79 = arith.negf %78 : vector<2x32xf32>
    %80 = math.exp %79 : vector<2x32xf32>
    %cst_42 = arith.constant 1.000000e+00 : f32
    %81 = vector.broadcast %cst_42 : f32 to vector<2x32xf32>
    %82 = arith.addf %81, %80 : vector<2x32xf32>
    %83 = arith.divf %81, %82 : vector<2x32xf32>
    %84 = arith.mulf %75, %58 : vector<2x32xf32>
    %85 = arith.mulf %69, %77 : vector<2x32xf32>
    %86 = arith.addf %84, %85 : vector<2x32xf32>
    %87 = math.tanh %86 : vector<2x32xf32>
    %88 = arith.mulf %83, %87 : vector<2x32xf32>
    %c0_43 = arith.constant 0 : index
    %c0_44 = arith.constant 0 : index
    %89 = vector.load %arg12[%c0_43, %c0_44] : memref<2x32xf32, #tpu.memory_space<vmem>>, vector<2x32xf32>
    tpu.vector_store %arg12[%c0_43, %c0_44], %88 {strides = array<i32>} : memref<2x32xf32, #tpu.memory_space<vmem>>, vector<2x32xf32>,
    %c0_45 = arith.constant 0 : index
    %c0_46 = arith.constant 0 : index
    %90 = vector.load %arg13[%c0_45, %c0_46] : memref<2x32xf32, #tpu.memory_space<vmem>>, vector<2x32xf32>
    tpu.vector_store %arg13[%c0_45, %c0_46], %86 {strides = array<i32>} : memref<2x32xf32, #tpu.memory_space<vmem>>, vector<2x32xf32>,
    %91 = arith.index_cast %56 : i32 to index
    %c0_47 = arith.constant 0 : index
    %92 = vector.load %arg11[%91, %c0_47] : memref<16x32xf32, #tpu.memory_space<vmem>>, vector<2x32xf32>
    tpu.vector_store %arg11[%91, %c0_47], %88 {strides = array<i32>} : memref<16x32xf32, #tpu.memory_space<vmem>>, vector<2x32xf32>,
    %c2_i32_48 = arith.constant 2 : i32
    %c1_i32_49 = arith.constant 1 : i32
    %93 = arith.muli %c2_i32_48, %c1_i32_49 : i32
    %c0_i32_50 = arith.constant 0 : i32
    %94 = arith.addi %c0_i32_50, %93 : i32
    %c2_i32_51 = arith.constant 2 : i32
    %95 = arith.muli %94, %c2_i32_51 : i32
    %96 = tpu.assume_multiple %95, 2 : i32
    %c0_52 = arith.constant 0 : index
    %c0_53 = arith.constant 0 : index
    %97 = vector.load %arg12[%c0_52, %c0_53] : memref<2x32xf32, #tpu.memory_space<vmem>>, vector<2x32xf32>
    %c0_54 = arith.constant 0 : index
    %c0_55 = arith.constant 0 : index
    %98 = vector.load %arg13[%c0_54, %c0_55] : memref<2x32xf32, #tpu.memory_space<vmem>>, vector<2x32xf32>
    %99 = arith.index_cast %96 : i32 to index
    %c0_56 = arith.constant 0 : index
    %100 = vector.load %arg10[%99, %c0_56] : memref<16x128xf32, #tpu.memory_space<vmem>>, vector<2x128xf32>
    %101 = arith.truncf %97 : vector<2x32xf32> to vector<2x32xbf16>
    %cst_57 = arith.constant dense<0.000000e+00> : vector<2x128xf32>
    %102 = tpu.matmul %101, %1, %cst_57 {dimension_numbers = #tpu.dot_dimension_numbers<[1], [0], [0], [1], [0, 0, 1, 1], [], []>} : vector<2x32xbf16>, vector<32x128xbf16>, vector<2x128xf32> -> vector<2x128xf32>
    %103 = arith.addf %100, %102 : vector<2x128xf32>
    %104 = vector.extract_strided_slice %103 {offsets = [0, 0], sizes = [2, 32], strides = [1, 1]} : vector<2x128xf32> to vector<2x32xf32>
    %105 = arith.negf %104 : vector<2x32xf32>
    %106 = math.exp %105 : vector<2x32xf32>
    %cst_58 = arith.constant 1.000000e+00 : f32
    %107 = vector.broadcast %cst_58 : f32 to vector<2x32xf32>
    %108 = arith.addf %107, %106 : vector<2x32xf32>
    %109 = arith.divf %107, %108 : vector<2x32xf32>
    %110 = vector.extract_strided_slice %103 {offsets = [0, 32], sizes = [2, 32], strides = [1, 1]} : vector<2x128xf32> to vector<2x32xf32>
    %111 = arith.negf %110 : vector<2x32xf32>
    %112 = math.exp %111 : vector<2x32xf32>
    %cst_59 = arith.constant 1.000000e+00 : f32
    %113 = vector.broadcast %cst_59 : f32 to vector<2x32xf32>
    %114 = arith.addf %113, %112 : vector<2x32xf32>
    %115 = arith.divf %113, %114 : vector<2x32xf32>
    %116 = vector.extract_strided_slice %103 {offsets = [0, 64], sizes = [2, 32], strides = [1, 1]} : vector<2x128xf32> to vector<2x32xf32>
    %117 = math.tanh %116 : vector<2x32xf32>
    %118 = vector.extract_strided_slice %103 {offsets = [0, 96], sizes = [2, 32], strides = [1, 1]} : vector<2x128xf32> to vector<2x32xf32>
    %119 = arith.negf %118 : vector<2x32xf32>
    %120 = math.exp %119 : vector<2x32xf32>
    %cst_60 = arith.constant 1.000000e+00 : f32
    %121 = vector.broadcast %cst_60 : f32 to vector<2x32xf32>
    %122 = arith.addf %121, %120 : vector<2x32xf32>
    %123 = arith.divf %121, %122 : vector<2x32xf32>
    %124 = arith.mulf %115, %98 : vector<2x32xf32>
    %125 = arith.mulf %109, %117 : vector<2x32xf32>
    %126 = arith.addf %124, %125 : vector<2x32xf32>
    %127 = math.tanh %126 : vector<2x32xf32>
    %128 = arith.mulf %123, %127 : vector<2x32xf32>
    %c0_61 = arith.constant 0 : index
    %c0_62 = arith.constant 0 : index
    %129 = vector.load %arg12[%c0_61, %c0_62] : memref<2x32xf32, #tpu.memory_space<vmem>>, vector<2x32xf32>
    tpu.vector_store %arg12[%c0_61, %c0_62], %128 {strides = array<i32>} : memref<2x32xf32, #tpu.memory_space<vmem>>, vector<2x32xf32>,
    %c0_63 = arith.constant 0 : index
    %c0_64 = arith.constant 0 : index
    %130 = vector.load %arg13[%c0_63, %c0_64] : memref<2x32xf32, #tpu.memory_space<vmem>>, vector<2x32xf32>
    tpu.vector_store %arg13[%c0_63, %c0_64], %126 {strides = array<i32>} : memref<2x32xf32, #tpu.memory_space<vmem>>, vector<2x32xf32>,
    %131 = arith.index_cast %96 : i32 to index
    %c0_65 = arith.constant 0 : index
    %132 = vector.load %arg11[%131, %c0_65] : memref<16x32xf32, #tpu.memory_space<vmem>>, vector<2x32xf32>
    tpu.vector_store %arg11[%131, %c0_65], %128 {strides = array<i32>} : memref<16x32xf32, #tpu.memory_space<vmem>>, vector<2x32xf32>,
    %c3_i32 = arith.constant 3 : i32
    %c1_i32_66 = arith.constant 1 : i32
    %133 = arith.muli %c3_i32, %c1_i32_66 : i32
    %c0_i32_67 = arith.constant 0 : i32
    %134 = arith.addi %c0_i32_67, %133 : i32
    %c2_i32_68 = arith.constant 2 : i32
    %135 = arith.muli %134, %c2_i32_68 : i32
    %136 = tpu.assume_multiple %135, 2 : i32
    %c0_69 = arith.constant 0 : index
    %c0_70 = arith.constant 0 : index
    %137 = vector.load %arg12[%c0_69, %c0_70] : memref<2x32xf32, #tpu.memory_space<vmem>>, vector<2x32xf32>
    %c0_71 = arith.constant 0 : index
    %c0_72 = arith.constant 0 : index
    %138 = vector.load %arg13[%c0_71, %c0_72] : memref<2x32xf32, #tpu.memory_space<vmem>>, vector<2x32xf32>
    %139 = arith.index_cast %136 : i32 to index
    %c0_73 = arith.constant 0 : index
    %140 = vector.load %arg10[%139, %c0_73] : memref<16x128xf32, #tpu.memory_space<vmem>>, vector<2x128xf32>
    %141 = arith.truncf %137 : vector<2x32xf32> to vector<2x32xbf16>
    %cst_74 = arith.constant dense<0.000000e+00> : vector<2x128xf32>
    %142 = tpu.matmul %141, %1, %cst_74 {dimension_numbers = #tpu.dot_dimension_numbers<[1], [0], [0], [1], [0, 0, 1, 1], [], []>} : vector<2x32xbf16>, vector<32x128xbf16>, vector<2x128xf32> -> vector<2x128xf32>
    %143 = arith.addf %140, %142 : vector<2x128xf32>
    %144 = vector.extract_strided_slice %143 {offsets = [0, 0], sizes = [2, 32], strides = [1, 1]} : vector<2x128xf32> to vector<2x32xf32>
    %145 = arith.negf %144 : vector<2x32xf32>
    %146 = math.exp %145 : vector<2x32xf32>
    %cst_75 = arith.constant 1.000000e+00 : f32
    %147 = vector.broadcast %cst_75 : f32 to vector<2x32xf32>
    %148 = arith.addf %147, %146 : vector<2x32xf32>
    %149 = arith.divf %147, %148 : vector<2x32xf32>
    %150 = vector.extract_strided_slice %143 {offsets = [0, 32], sizes = [2, 32], strides = [1, 1]} : vector<2x128xf32> to vector<2x32xf32>
    %151 = arith.negf %150 : vector<2x32xf32>
    %152 = math.exp %151 : vector<2x32xf32>
    %cst_76 = arith.constant 1.000000e+00 : f32
    %153 = vector.broadcast %cst_76 : f32 to vector<2x32xf32>
    %154 = arith.addf %153, %152 : vector<2x32xf32>
    %155 = arith.divf %153, %154 : vector<2x32xf32>
    %156 = vector.extract_strided_slice %143 {offsets = [0, 64], sizes = [2, 32], strides = [1, 1]} : vector<2x128xf32> to vector<2x32xf32>
    %157 = math.tanh %156 : vector<2x32xf32>
    %158 = vector.extract_strided_slice %143 {offsets = [0, 96], sizes = [2, 32], strides = [1, 1]} : vector<2x128xf32> to vector<2x32xf32>
    %159 = arith.negf %158 : vector<2x32xf32>
    %160 = math.exp %159 : vector<2x32xf32>
    %cst_77 = arith.constant 1.000000e+00 : f32
    %161 = vector.broadcast %cst_77 : f32 to vector<2x32xf32>
    %162 = arith.addf %161, %160 : vector<2x32xf32>
    %163 = arith.divf %161, %162 : vector<2x32xf32>
    %164 = arith.mulf %155, %138 : vector<2x32xf32>
    %165 = arith.mulf %149, %157 : vector<2x32xf32>
    %166 = arith.addf %164, %165 : vector<2x32xf32>
    %167 = math.tanh %166 : vector<2x32xf32>
    %168 = arith.mulf %163, %167 : vector<2x32xf32>
    %c0_78 = arith.constant 0 : index
    %c0_79 = arith.constant 0 : index
    %169 = vector.load %arg12[%c0_78, %c0_79] : memref<2x32xf32, #tpu.memory_space<vmem>>, vector<2x32xf32>
    tpu.vector_store %arg12[%c0_78, %c0_79], %168 {strides = array<i32>} : memref<2x32xf32, #tpu.memory_space<vmem>>, vector<2x32xf32>,
    %c0_80 = arith.constant 0 : index
    %c0_81 = arith.constant 0 : index
    %170 = vector.load %arg13[%c0_80, %c0_81] : memref<2x32xf32, #tpu.memory_space<vmem>>, vector<2x32xf32>
    tpu.vector_store %arg13[%c0_80, %c0_81], %166 {strides = array<i32>} : memref<2x32xf32, #tpu.memory_space<vmem>>, vector<2x32xf32>,
    %171 = arith.index_cast %136 : i32 to index
    %c0_82 = arith.constant 0 : index
    %172 = vector.load %arg11[%171, %c0_82] : memref<16x32xf32, #tpu.memory_space<vmem>>, vector<2x32xf32>
    tpu.vector_store %arg11[%171, %c0_82], %168 {strides = array<i32>} : memref<16x32xf32, #tpu.memory_space<vmem>>, vector<2x32xf32>,
    %c4_i32 = arith.constant 4 : i32
    %c1_i32_83 = arith.constant 1 : i32
    %173 = arith.muli %c4_i32, %c1_i32_83 : i32
    %c0_i32_84 = arith.constant 0 : i32
    %174 = arith.addi %c0_i32_84, %173 : i32
    %c2_i32_85 = arith.constant 2 : i32
    %175 = arith.muli %174, %c2_i32_85 : i32
    %176 = tpu.assume_multiple %175, 2 : i32
    %c0_86 = arith.constant 0 : index
    %c0_87 = arith.constant 0 : index
    %177 = vector.load %arg12[%c0_86, %c0_87] : memref<2x32xf32, #tpu.memory_space<vmem>>, vector<2x32xf32>
    %c0_88 = arith.constant 0 : index
    %c0_89 = arith.constant 0 : index
    %178 = vector.load %arg13[%c0_88, %c0_89] : memref<2x32xf32, #tpu.memory_space<vmem>>, vector<2x32xf32>
    %179 = arith.index_cast %176 : i32 to index
    %c0_90 = arith.constant 0 : index
    %180 = vector.load %arg10[%179, %c0_90] : memref<16x128xf32, #tpu.memory_space<vmem>>, vector<2x128xf32>
    %181 = arith.truncf %177 : vector<2x32xf32> to vector<2x32xbf16>
    %cst_91 = arith.constant dense<0.000000e+00> : vector<2x128xf32>
    %182 = tpu.matmul %181, %1, %cst_91 {dimension_numbers = #tpu.dot_dimension_numbers<[1], [0], [0], [1], [0, 0, 1, 1], [], []>} : vector<2x32xbf16>, vector<32x128xbf16>, vector<2x128xf32> -> vector<2x128xf32>
    %183 = arith.addf %180, %182 : vector<2x128xf32>
    %184 = vector.extract_strided_slice %183 {offsets = [0, 0], sizes = [2, 32], strides = [1, 1]} : vector<2x128xf32> to vector<2x32xf32>
    %185 = arith.negf %184 : vector<2x32xf32>
    %186 = math.exp %185 : vector<2x32xf32>
    %cst_92 = arith.constant 1.000000e+00 : f32
    %187 = vector.broadcast %cst_92 : f32 to vector<2x32xf32>
    %188 = arith.addf %187, %186 : vector<2x32xf32>
    %189 = arith.divf %187, %188 : vector<2x32xf32>
    %190 = vector.extract_strided_slice %183 {offsets = [0, 32], sizes = [2, 32], strides = [1, 1]} : vector<2x128xf32> to vector<2x32xf32>
    %191 = arith.negf %190 : vector<2x32xf32>
    %192 = math.exp %191 : vector<2x32xf32>
    %cst_93 = arith.constant 1.000000e+00 : f32
    %193 = vector.broadcast %cst_93 : f32 to vector<2x32xf32>
    %194 = arith.addf %193, %192 : vector<2x32xf32>
    %195 = arith.divf %193, %194 : vector<2x32xf32>
    %196 = vector.extract_strided_slice %183 {offsets = [0, 64], sizes = [2, 32], strides = [1, 1]} : vector<2x128xf32> to vector<2x32xf32>
    %197 = math.tanh %196 : vector<2x32xf32>
    %198 = vector.extract_strided_slice %183 {offsets = [0, 96], sizes = [2, 32], strides = [1, 1]} : vector<2x128xf32> to vector<2x32xf32>
    %199 = arith.negf %198 : vector<2x32xf32>
    %200 = math.exp %199 : vector<2x32xf32>
    %cst_94 = arith.constant 1.000000e+00 : f32
    %201 = vector.broadcast %cst_94 : f32 to vector<2x32xf32>
    %202 = arith.addf %201, %200 : vector<2x32xf32>
    %203 = arith.divf %201, %202 : vector<2x32xf32>
    %204 = arith.mulf %195, %178 : vector<2x32xf32>
    %205 = arith.mulf %189, %197 : vector<2x32xf32>
    %206 = arith.addf %204, %205 : vector<2x32xf32>
    %207 = math.tanh %206 : vector<2x32xf32>
    %208 = arith.mulf %203, %207 : vector<2x32xf32>
    %c0_95 = arith.constant 0 : index
    %c0_96 = arith.constant 0 : index
    %209 = vector.load %arg12[%c0_95, %c0_96] : memref<2x32xf32, #tpu.memory_space<vmem>>, vector<2x32xf32>
    tpu.vector_store %arg12[%c0_95, %c0_96], %208 {strides = array<i32>} : memref<2x32xf32, #tpu.memory_space<vmem>>, vector<2x32xf32>,
    %c0_97 = arith.constant 0 : index
    %c0_98 = arith.constant 0 : index
    %210 = vector.load %arg13[%c0_97, %c0_98] : memref<2x32xf32, #tpu.memory_space<vmem>>, vector<2x32xf32>
    tpu.vector_store %arg13[%c0_97, %c0_98], %206 {strides = array<i32>} : memref<2x32xf32, #tpu.memory_space<vmem>>, vector<2x32xf32>,
    %211 = arith.index_cast %176 : i32 to index
    %c0_99 = arith.constant 0 : index
    %212 = vector.load %arg11[%211, %c0_99] : memref<16x32xf32, #tpu.memory_space<vmem>>, vector<2x32xf32>
    tpu.vector_store %arg11[%211, %c0_99], %208 {strides = array<i32>} : memref<16x32xf32, #tpu.memory_space<vmem>>, vector<2x32xf32>,
    %c5_i32 = arith.constant 5 : i32
    %c1_i32_100 = arith.constant 1 : i32
    %213 = arith.muli %c5_i32, %c1_i32_100 : i32
    %c0_i32_101 = arith.constant 0 : i32
    %214 = arith.addi %c0_i32_101, %213 : i32
    %c2_i32_102 = arith.constant 2 : i32
    %215 = arith.muli %214, %c2_i32_102 : i32
    %216 = tpu.assume_multiple %215, 2 : i32
    %c0_103 = arith.constant 0 : index
    %c0_104 = arith.constant 0 : index
    %217 = vector.load %arg12[%c0_103, %c0_104] : memref<2x32xf32, #tpu.memory_space<vmem>>, vector<2x32xf32>
    %c0_105 = arith.constant 0 : index
    %c0_106 = arith.constant 0 : index
    %218 = vector.load %arg13[%c0_105, %c0_106] : memref<2x32xf32, #tpu.memory_space<vmem>>, vector<2x32xf32>
    %219 = arith.index_cast %216 : i32 to index
    %c0_107 = arith.constant 0 : index
    %220 = vector.load %arg10[%219, %c0_107] : memref<16x128xf32, #tpu.memory_space<vmem>>, vector<2x128xf32>
    %221 = arith.truncf %217 : vector<2x32xf32> to vector<2x32xbf16>
    %cst_108 = arith.constant dense<0.000000e+00> : vector<2x128xf32>
    %222 = tpu.matmul %221, %1, %cst_108 {dimension_numbers = #tpu.dot_dimension_numbers<[1], [0], [0], [1], [0, 0, 1, 1], [], []>} : vector<2x32xbf16>, vector<32x128xbf16>, vector<2x128xf32> -> vector<2x128xf32>
    %223 = arith.addf %220, %222 : vector<2x128xf32>
    %224 = vector.extract_strided_slice %223 {offsets = [0, 0], sizes = [2, 32], strides = [1, 1]} : vector<2x128xf32> to vector<2x32xf32>
    %225 = arith.negf %224 : vector<2x32xf32>
    %226 = math.exp %225 : vector<2x32xf32>
    %cst_109 = arith.constant 1.000000e+00 : f32
    %227 = vector.broadcast %cst_109 : f32 to vector<2x32xf32>
    %228 = arith.addf %227, %226 : vector<2x32xf32>
    %229 = arith.divf %227, %228 : vector<2x32xf32>
    %230 = vector.extract_strided_slice %223 {offsets = [0, 32], sizes = [2, 32], strides = [1, 1]} : vector<2x128xf32> to vector<2x32xf32>
    %231 = arith.negf %230 : vector<2x32xf32>
    %232 = math.exp %231 : vector<2x32xf32>
    %cst_110 = arith.constant 1.000000e+00 : f32
    %233 = vector.broadcast %cst_110 : f32 to vector<2x32xf32>
    %234 = arith.addf %233, %232 : vector<2x32xf32>
    %235 = arith.divf %233, %234 : vector<2x32xf32>
    %236 = vector.extract_strided_slice %223 {offsets = [0, 64], sizes = [2, 32], strides = [1, 1]} : vector<2x128xf32> to vector<2x32xf32>
    %237 = math.tanh %236 : vector<2x32xf32>
    %238 = vector.extract_strided_slice %223 {offsets = [0, 96], sizes = [2, 32], strides = [1, 1]} : vector<2x128xf32> to vector<2x32xf32>
    %239 = arith.negf %238 : vector<2x32xf32>
    %240 = math.exp %239 : vector<2x32xf32>
    %cst_111 = arith.constant 1.000000e+00 : f32
    %241 = vector.broadcast %cst_111 : f32 to vector<2x32xf32>
    %242 = arith.addf %241, %240 : vector<2x32xf32>
    %243 = arith.divf %241, %242 : vector<2x32xf32>
    %244 = arith.mulf %235, %218 : vector<2x32xf32>
    %245 = arith.mulf %229, %237 : vector<2x32xf32>
    %246 = arith.addf %244, %245 : vector<2x32xf32>
    %247 = math.tanh %246 : vector<2x32xf32>
    %248 = arith.mulf %243, %247 : vector<2x32xf32>
    %c0_112 = arith.constant 0 : index
    %c0_113 = arith.constant 0 : index
    %249 = vector.load %arg12[%c0_112, %c0_113] : memref<2x32xf32, #tpu.memory_space<vmem>>, vector<2x32xf32>
    tpu.vector_store %arg12[%c0_112, %c0_113], %248 {strides = array<i32>} : memref<2x32xf32, #tpu.memory_space<vmem>>, vector<2x32xf32>,
    %c0_114 = arith.constant 0 : index
    %c0_115 = arith.constant 0 : index
    %250 = vector.load %arg13[%c0_114, %c0_115] : memref<2x32xf32, #tpu.memory_space<vmem>>, vector<2x32xf32>
    tpu.vector_store %arg13[%c0_114, %c0_115], %246 {strides = array<i32>} : memref<2x32xf32, #tpu.memory_space<vmem>>, vector<2x32xf32>,
    %251 = arith.index_cast %216 : i32 to index
    %c0_116 = arith.constant 0 : index
    %252 = vector.load %arg11[%251, %c0_116] : memref<16x32xf32, #tpu.memory_space<vmem>>, vector<2x32xf32>
    tpu.vector_store %arg11[%251, %c0_116], %248 {strides = array<i32>} : memref<16x32xf32, #tpu.memory_space<vmem>>, vector<2x32xf32>,
    %c6_i32 = arith.constant 6 : i32
    %c1_i32_117 = arith.constant 1 : i32
    %253 = arith.muli %c6_i32, %c1_i32_117 : i32
    %c0_i32_118 = arith.constant 0 : i32
    %254 = arith.addi %c0_i32_118, %253 : i32
    %c2_i32_119 = arith.constant 2 : i32
    %255 = arith.muli %254, %c2_i32_119 : i32
    %256 = tpu.assume_multiple %255, 2 : i32
    %c0_120 = arith.constant 0 : index
    %c0_121 = arith.constant 0 : index
    %257 = vector.load %arg12[%c0_120, %c0_121] : memref<2x32xf32, #tpu.memory_space<vmem>>, vector<2x32xf32>
    %c0_122 = arith.constant 0 : index
    %c0_123 = arith.constant 0 : index
    %258 = vector.load %arg13[%c0_122, %c0_123] : memref<2x32xf32, #tpu.memory_space<vmem>>, vector<2x32xf32>
    %259 = arith.index_cast %256 : i32 to index
    %c0_124 = arith.constant 0 : index
    %260 = vector.load %arg10[%259, %c0_124] : memref<16x128xf32, #tpu.memory_space<vmem>>, vector<2x128xf32>
    %261 = arith.truncf %257 : vector<2x32xf32> to vector<2x32xbf16>
    %cst_125 = arith.constant dense<0.000000e+00> : vector<2x128xf32>
    %262 = tpu.matmul %261, %1, %cst_125 {dimension_numbers = #tpu.dot_dimension_numbers<[1], [0], [0], [1], [0, 0, 1, 1], [], []>} : vector<2x32xbf16>, vector<32x128xbf16>, vector<2x128xf32> -> vector<2x128xf32>
    %263 = arith.addf %260, %262 : vector<2x128xf32>
    %264 = vector.extract_strided_slice %263 {offsets = [0, 0], sizes = [2, 32], strides = [1, 1]} : vector<2x128xf32> to vector<2x32xf32>
    %265 = arith.negf %264 : vector<2x32xf32>
    %266 = math.exp %265 : vector<2x32xf32>
    %cst_126 = arith.constant 1.000000e+00 : f32
    %267 = vector.broadcast %cst_126 : f32 to vector<2x32xf32>
    %268 = arith.addf %267, %266 : vector<2x32xf32>
    %269 = arith.divf %267, %268 : vector<2x32xf32>
    %270 = vector.extract_strided_slice %263 {offsets = [0, 32], sizes = [2, 32], strides = [1, 1]} : vector<2x128xf32> to vector<2x32xf32>
    %271 = arith.negf %270 : vector<2x32xf32>
    %272 = math.exp %271 : vector<2x32xf32>
    %cst_127 = arith.constant 1.000000e+00 : f32
    %273 = vector.broadcast %cst_127 : f32 to vector<2x32xf32>
    %274 = arith.addf %273, %272 : vector<2x32xf32>
    %275 = arith.divf %273, %274 : vector<2x32xf32>
    %276 = vector.extract_strided_slice %263 {offsets = [0, 64], sizes = [2, 32], strides = [1, 1]} : vector<2x128xf32> to vector<2x32xf32>
    %277 = math.tanh %276 : vector<2x32xf32>
    %278 = vector.extract_strided_slice %263 {offsets = [0, 96], sizes = [2, 32], strides = [1, 1]} : vector<2x128xf32> to vector<2x32xf32>
    %279 = arith.negf %278 : vector<2x32xf32>
    %280 = math.exp %279 : vector<2x32xf32>
    %cst_128 = arith.constant 1.000000e+00 : f32
    %281 = vector.broadcast %cst_128 : f32 to vector<2x32xf32>
    %282 = arith.addf %281, %280 : vector<2x32xf32>
    %283 = arith.divf %281, %282 : vector<2x32xf32>
    %284 = arith.mulf %275, %258 : vector<2x32xf32>
    %285 = arith.mulf %269, %277 : vector<2x32xf32>
    %286 = arith.addf %284, %285 : vector<2x32xf32>
    %287 = math.tanh %286 : vector<2x32xf32>
    %288 = arith.mulf %283, %287 : vector<2x32xf32>
    %c0_129 = arith.constant 0 : index
    %c0_130 = arith.constant 0 : index
    %289 = vector.load %arg12[%c0_129, %c0_130] : memref<2x32xf32, #tpu.memory_space<vmem>>, vector<2x32xf32>
    tpu.vector_store %arg12[%c0_129, %c0_130], %288 {strides = array<i32>} : memref<2x32xf32, #tpu.memory_space<vmem>>, vector<2x32xf32>,
    %c0_131 = arith.constant 0 : index
    %c0_132 = arith.constant 0 : index
    %290 = vector.load %arg13[%c0_131, %c0_132] : memref<2x32xf32, #tpu.memory_space<vmem>>, vector<2x32xf32>
    tpu.vector_store %arg13[%c0_131, %c0_132], %286 {strides = array<i32>} : memref<2x32xf32, #tpu.memory_space<vmem>>, vector<2x32xf32>,
    %291 = arith.index_cast %256 : i32 to index
    %c0_133 = arith.constant 0 : index
    %292 = vector.load %arg11[%291, %c0_133] : memref<16x32xf32, #tpu.memory_space<vmem>>, vector<2x32xf32>
    tpu.vector_store %arg11[%291, %c0_133], %288 {strides = array<i32>} : memref<16x32xf32, #tpu.memory_space<vmem>>, vector<2x32xf32>,
    %c7_i32 = arith.constant 7 : i32
    %c1_i32_134 = arith.constant 1 : i32
    %293 = arith.muli %c7_i32, %c1_i32_134 : i32
    %c0_i32_135 = arith.constant 0 : i32
    %294 = arith.addi %c0_i32_135, %293 : i32
    %c2_i32_136 = arith.constant 2 : i32
    %295 = arith.muli %294, %c2_i32_136 : i32
    %296 = tpu.assume_multiple %295, 2 : i32
    %c0_137 = arith.constant 0 : index
    %c0_138 = arith.constant 0 : index
    %297 = vector.load %arg12[%c0_137, %c0_138] : memref<2x32xf32, #tpu.memory_space<vmem>>, vector<2x32xf32>
    %c0_139 = arith.constant 0 : index
    %c0_140 = arith.constant 0 : index
    %298 = vector.load %arg13[%c0_139, %c0_140] : memref<2x32xf32, #tpu.memory_space<vmem>>, vector<2x32xf32>
    %299 = arith.index_cast %296 : i32 to index
    %c0_141 = arith.constant 0 : index
    %300 = vector.load %arg10[%299, %c0_141] : memref<16x128xf32, #tpu.memory_space<vmem>>, vector<2x128xf32>
    %301 = arith.truncf %297 : vector<2x32xf32> to vector<2x32xbf16>
    %cst_142 = arith.constant dense<0.000000e+00> : vector<2x128xf32>
    %302 = tpu.matmul %301, %1, %cst_142 {dimension_numbers = #tpu.dot_dimension_numbers<[1], [0], [0], [1], [0, 0, 1, 1], [], []>} : vector<2x32xbf16>, vector<32x128xbf16>, vector<2x128xf32> -> vector<2x128xf32>
    %303 = arith.addf %300, %302 : vector<2x128xf32>
    %304 = vector.extract_strided_slice %303 {offsets = [0, 0], sizes = [2, 32], strides = [1, 1]} : vector<2x128xf32> to vector<2x32xf32>
    %305 = arith.negf %304 : vector<2x32xf32>
    %306 = math.exp %305 : vector<2x32xf32>
    %cst_143 = arith.constant 1.000000e+00 : f32
    %307 = vector.broadcast %cst_143 : f32 to vector<2x32xf32>
    %308 = arith.addf %307, %306 : vector<2x32xf32>
    %309 = arith.divf %307, %308 : vector<2x32xf32>
    %310 = vector.extract_strided_slice %303 {offsets = [0, 32], sizes = [2, 32], strides = [1, 1]} : vector<2x128xf32> to vector<2x32xf32>
    %311 = arith.negf %310 : vector<2x32xf32>
    %312 = math.exp %311 : vector<2x32xf32>
    %cst_144 = arith.constant 1.000000e+00 : f32
    %313 = vector.broadcast %cst_144 : f32 to vector<2x32xf32>
    %314 = arith.addf %313, %312 : vector<2x32xf32>
    %315 = arith.divf %313, %314 : vector<2x32xf32>
    %316 = vector.extract_strided_slice %303 {offsets = [0, 64], sizes = [2, 32], strides = [1, 1]} : vector<2x128xf32> to vector<2x32xf32>
    %317 = math.tanh %316 : vector<2x32xf32>
    %318 = vector.extract_strided_slice %303 {offsets = [0, 96], sizes = [2, 32], strides = [1, 1]} : vector<2x128xf32> to vector<2x32xf32>
    %319 = arith.negf %318 : vector<2x32xf32>
    %320 = math.exp %319 : vector<2x32xf32>
    %cst_145 = arith.constant 1.000000e+00 : f32
    %321 = vector.broadcast %cst_145 : f32 to vector<2x32xf32>
    %322 = arith.addf %321, %320 : vector<2x32xf32>
    %323 = arith.divf %321, %322 : vector<2x32xf32>
    %324 = arith.mulf %315, %298 : vector<2x32xf32>
    %325 = arith.mulf %309, %317 : vector<2x32xf32>
    %326 = arith.addf %324, %325 : vector<2x32xf32>
    %327 = math.tanh %326 : vector<2x32xf32>
    %328 = arith.mulf %323, %327 : vector<2x32xf32>
    %c0_146 = arith.constant 0 : index
    %c0_147 = arith.constant 0 : index
    %329 = vector.load %arg12[%c0_146, %c0_147] : memref<2x32xf32, #tpu.memory_space<vmem>>, vector<2x32xf32>
    tpu.vector_store %arg12[%c0_146, %c0_147], %328 {strides = array<i32>} : memref<2x32xf32, #tpu.memory_space<vmem>>, vector<2x32xf32>,
    %c0_148 = arith.constant 0 : index
    %c0_149 = arith.constant 0 : index
    %330 = vector.load %arg13[%c0_148, %c0_149] : memref<2x32xf32, #tpu.memory_space<vmem>>, vector<2x32xf32>
    tpu.vector_store %arg13[%c0_148, %c0_149], %326 {strides = array<i32>} : memref<2x32xf32, #tpu.memory_space<vmem>>, vector<2x32xf32>,
    %331 = arith.index_cast %296 : i32 to index
    %c0_150 = arith.constant 0 : index
    %332 = vector.load %arg11[%331, %c0_150] : memref<16x32xf32, #tpu.memory_space<vmem>>, vector<2x32xf32>
    tpu.vector_store %arg11[%331, %c0_150], %328 {strides = array<i32>} : memref<16x32xf32, #tpu.memory_space<vmem>>, vector<2x32xf32>,
    %c8_i32 = arith.constant 8 : i32
    %c0_151 = arith.constant 0 : index
    %c0_152 = arith.constant 0 : index
    %333 = vector.load %arg4[%c0_151, %c0_152] : memref<32x128xbf16, #tpu.memory_space<vmem>>, vector<32x128xbf16>
    %c0_153 = arith.constant 0 : index
    %c0_154 = arith.constant 0 : index
    %334 = vector.load %arg5[%c0_153, %c0_154] : memref<32x128xbf16, #tpu.memory_space<vmem>>, vector<32x128xbf16>
    %c0_155 = arith.constant 0 : index
    %c0_156 = arith.constant 0 : index
    %335 = vector.load %arg6[%c0_155, %c0_156] : memref<1x128xf32, #tpu.memory_space<vmem>>, vector<1x128xf32>
    %c0_157 = arith.constant 0 : index
    %c0_158 = arith.constant 0 : index
    %336 = vector.load %arg11[%c0_157, %c0_158] : memref<16x32xf32, #tpu.memory_space<vmem>>, vector<16x32xf32>
    %337 = arith.truncf %336 : vector<16x32xf32> to vector<16x32xbf16>
    %cst_159 = arith.constant dense<0.000000e+00> : vector<16x128xf32>
    %338 = tpu.matmul %337, %333, %cst_159 {dimension_numbers = #tpu.dot_dimension_numbers<[1], [0], [0], [1], [0, 0, 1, 1], [], []>} : vector<16x32xbf16>, vector<32x128xbf16>, vector<16x128xf32> -> vector<16x128xf32>
    %339 = vector.broadcast %335 : vector<1x128xf32> to vector<16x128xf32>
    %340 = arith.addf %338, %339 : vector<16x128xf32>
    %c0_160 = arith.constant 0 : index
    %c0_161 = arith.constant 0 : index
    %341 = vector.load %arg10[%c0_160, %c0_161] : memref<16x128xf32, #tpu.memory_space<vmem>>, vector<16x128xf32>
    tpu.vector_store %arg10[%c0_160, %c0_161], %340 {strides = array<i32>} : memref<16x128xf32, #tpu.memory_space<vmem>>, vector<16x128xf32>,
    %cst_162 = arith.constant 0.000000e+00 : f32
    %342 = vector.broadcast %cst_162 : f32 to vector<2x32xf32>
    %c0_163 = arith.constant 0 : index
    %c0_164 = arith.constant 0 : index
    %343 = vector.load %arg12[%c0_163, %c0_164] : memref<2x32xf32, #tpu.memory_space<vmem>>, vector<2x32xf32>
    tpu.vector_store %arg12[%c0_163, %c0_164], %342 {strides = array<i32>} : memref<2x32xf32, #tpu.memory_space<vmem>>, vector<2x32xf32>,
    %cst_165 = arith.constant 0.000000e+00 : f32
    %344 = vector.broadcast %cst_165 : f32 to vector<2x32xf32>
    %c0_166 = arith.constant 0 : index
    %c0_167 = arith.constant 0 : index
    %345 = vector.load %arg13[%c0_166, %c0_167] : memref<2x32xf32, #tpu.memory_space<vmem>>, vector<2x32xf32>
    tpu.vector_store %arg13[%c0_166, %c0_167], %344 {strides = array<i32>} : memref<2x32xf32, #tpu.memory_space<vmem>>, vector<2x32xf32>,
    %c0_i32_168 = arith.constant 0 : i32
    %c1_i32_169 = arith.constant 1 : i32
    %346 = arith.muli %c0_i32_168, %c1_i32_169 : i32
    %c0_i32_170 = arith.constant 0 : i32
    %347 = arith.addi %c0_i32_170, %346 : i32
    %c2_i32_171 = arith.constant 2 : i32
    %348 = arith.muli %347, %c2_i32_171 : i32
    %349 = tpu.assume_multiple %348, 2 : i32
    %c0_172 = arith.constant 0 : index
    %c0_173 = arith.constant 0 : index
    %350 = vector.load %arg12[%c0_172, %c0_173] : memref<2x32xf32, #tpu.memory_space<vmem>>, vector<2x32xf32>
    %c0_174 = arith.constant 0 : index
    %c0_175 = arith.constant 0 : index
    %351 = vector.load %arg13[%c0_174, %c0_175] : memref<2x32xf32, #tpu.memory_space<vmem>>, vector<2x32xf32>
    %352 = arith.index_cast %349 : i32 to index
    %c0_176 = arith.constant 0 : index
    %353 = vector.load %arg10[%352, %c0_176] : memref<16x128xf32, #tpu.memory_space<vmem>>, vector<2x128xf32>
    %354 = arith.truncf %350 : vector<2x32xf32> to vector<2x32xbf16>
    %cst_177 = arith.constant dense<0.000000e+00> : vector<2x128xf32>
    %355 = tpu.matmul %354, %334, %cst_177 {dimension_numbers = #tpu.dot_dimension_numbers<[1], [0], [0], [1], [0, 0, 1, 1], [], []>} : vector<2x32xbf16>, vector<32x128xbf16>, vector<2x128xf32> -> vector<2x128xf32>
    %356 = arith.addf %353, %355 : vector<2x128xf32>
    %357 = vector.extract_strided_slice %356 {offsets = [0, 0], sizes = [2, 32], strides = [1, 1]} : vector<2x128xf32> to vector<2x32xf32>
    %358 = arith.negf %357 : vector<2x32xf32>
    %359 = math.exp %358 : vector<2x32xf32>
    %cst_178 = arith.constant 1.000000e+00 : f32
    %360 = vector.broadcast %cst_178 : f32 to vector<2x32xf32>
    %361 = arith.addf %360, %359 : vector<2x32xf32>
    %362 = arith.divf %360, %361 : vector<2x32xf32>
    %363 = vector.extract_strided_slice %356 {offsets = [0, 32], sizes = [2, 32], strides = [1, 1]} : vector<2x128xf32> to vector<2x32xf32>
    %364 = arith.negf %363 : vector<2x32xf32>
    %365 = math.exp %364 : vector<2x32xf32>
    %cst_179 = arith.constant 1.000000e+00 : f32
    %366 = vector.broadcast %cst_179 : f32 to vector<2x32xf32>
    %367 = arith.addf %366, %365 : vector<2x32xf32>
    %368 = arith.divf %366, %367 : vector<2x32xf32>
    %369 = vector.extract_strided_slice %356 {offsets = [0, 64], sizes = [2, 32], strides = [1, 1]} : vector<2x128xf32> to vector<2x32xf32>
    %370 = math.tanh %369 : vector<2x32xf32>
    %371 = vector.extract_strided_slice %356 {offsets = [0, 96], sizes = [2, 32], strides = [1, 1]} : vector<2x128xf32> to vector<2x32xf32>
    %372 = arith.negf %371 : vector<2x32xf32>
    %373 = math.exp %372 : vector<2x32xf32>
    %cst_180 = arith.constant 1.000000e+00 : f32
    %374 = vector.broadcast %cst_180 : f32 to vector<2x32xf32>
    %375 = arith.addf %374, %373 : vector<2x32xf32>
    %376 = arith.divf %374, %375 : vector<2x32xf32>
    %377 = arith.mulf %368, %351 : vector<2x32xf32>
    %378 = arith.mulf %362, %370 : vector<2x32xf32>
    %379 = arith.addf %377, %378 : vector<2x32xf32>
    %380 = math.tanh %379 : vector<2x32xf32>
    %381 = arith.mulf %376, %380 : vector<2x32xf32>
    %c0_181 = arith.constant 0 : index
    %c0_182 = arith.constant 0 : index
    %382 = vector.load %arg12[%c0_181, %c0_182] : memref<2x32xf32, #tpu.memory_space<vmem>>, vector<2x32xf32>
    tpu.vector_store %arg12[%c0_181, %c0_182], %381 {strides = array<i32>} : memref<2x32xf32, #tpu.memory_space<vmem>>, vector<2x32xf32>,
    %c0_183 = arith.constant 0 : index
    %c0_184 = arith.constant 0 : index
    %383 = vector.load %arg13[%c0_183, %c0_184] : memref<2x32xf32, #tpu.memory_space<vmem>>, vector<2x32xf32>
    tpu.vector_store %arg13[%c0_183, %c0_184], %379 {strides = array<i32>} : memref<2x32xf32, #tpu.memory_space<vmem>>, vector<2x32xf32>,
    %384 = vector.extract_strided_slice %381 {offsets = [1, 0], sizes = [1, 32], strides = [1, 1]} : vector<2x32xf32> to vector<1x32xf32>
    %385 = arith.index_cast %347 : i32 to index
    %c0_185 = arith.constant 0 : index
    %386 = vector.load %arg14[%385, %c0_185] : memref<8x32xf32, #tpu.memory_space<vmem>>, vector<1x32xf32>
    tpu.vector_store %arg14[%385, %c0_185], %384 {strides = array<i32>} : memref<8x32xf32, #tpu.memory_space<vmem>>, vector<1x32xf32>,
    %c1_i32_186 = arith.constant 1 : i32
    %c1_i32_187 = arith.constant 1 : i32
    %387 = arith.muli %c1_i32_186, %c1_i32_187 : i32
    %c0_i32_188 = arith.constant 0 : i32
    %388 = arith.addi %c0_i32_188, %387 : i32
    %c2_i32_189 = arith.constant 2 : i32
    %389 = arith.muli %388, %c2_i32_189 : i32
    %390 = tpu.assume_multiple %389, 2 : i32
    %c0_190 = arith.constant 0 : index
    %c0_191 = arith.constant 0 : index
    %391 = vector.load %arg12[%c0_190, %c0_191] : memref<2x32xf32, #tpu.memory_space<vmem>>, vector<2x32xf32>
    %c0_192 = arith.constant 0 : index
    %c0_193 = arith.constant 0 : index
    %392 = vector.load %arg13[%c0_192, %c0_193] : memref<2x32xf32, #tpu.memory_space<vmem>>, vector<2x32xf32>
    %393 = arith.index_cast %390 : i32 to index
    %c0_194 = arith.constant 0 : index
    %394 = vector.load %arg10[%393, %c0_194] : memref<16x128xf32, #tpu.memory_space<vmem>>, vector<2x128xf32>
    %395 = arith.truncf %391 : vector<2x32xf32> to vector<2x32xbf16>
    %cst_195 = arith.constant dense<0.000000e+00> : vector<2x128xf32>
    %396 = tpu.matmul %395, %334, %cst_195 {dimension_numbers = #tpu.dot_dimension_numbers<[1], [0], [0], [1], [0, 0, 1, 1], [], []>} : vector<2x32xbf16>, vector<32x128xbf16>, vector<2x128xf32> -> vector<2x128xf32>
    %397 = arith.addf %394, %396 : vector<2x128xf32>
    %398 = vector.extract_strided_slice %397 {offsets = [0, 0], sizes = [2, 32], strides = [1, 1]} : vector<2x128xf32> to vector<2x32xf32>
    %399 = arith.negf %398 : vector<2x32xf32>
    %400 = math.exp %399 : vector<2x32xf32>
    %cst_196 = arith.constant 1.000000e+00 : f32
    %401 = vector.broadcast %cst_196 : f32 to vector<2x32xf32>
    %402 = arith.addf %401, %400 : vector<2x32xf32>
    %403 = arith.divf %401, %402 : vector<2x32xf32>
    %404 = vector.extract_strided_slice %397 {offsets = [0, 32], sizes = [2, 32], strides = [1, 1]} : vector<2x128xf32> to vector<2x32xf32>
    %405 = arith.negf %404 : vector<2x32xf32>
    %406 = math.exp %405 : vector<2x32xf32>
    %cst_197 = arith.constant 1.000000e+00 : f32
    %407 = vector.broadcast %cst_197 : f32 to vector<2x32xf32>
    %408 = arith.addf %407, %406 : vector<2x32xf32>
    %409 = arith.divf %407, %408 : vector<2x32xf32>
    %410 = vector.extract_strided_slice %397 {offsets = [0, 64], sizes = [2, 32], strides = [1, 1]} : vector<2x128xf32> to vector<2x32xf32>
    %411 = math.tanh %410 : vector<2x32xf32>
    %412 = vector.extract_strided_slice %397 {offsets = [0, 96], sizes = [2, 32], strides = [1, 1]} : vector<2x128xf32> to vector<2x32xf32>
    %413 = arith.negf %412 : vector<2x32xf32>
    %414 = math.exp %413 : vector<2x32xf32>
    %cst_198 = arith.constant 1.000000e+00 : f32
    %415 = vector.broadcast %cst_198 : f32 to vector<2x32xf32>
    %416 = arith.addf %415, %414 : vector<2x32xf32>
    %417 = arith.divf %415, %416 : vector<2x32xf32>
    %418 = arith.mulf %409, %392 : vector<2x32xf32>
    %419 = arith.mulf %403, %411 : vector<2x32xf32>
    %420 = arith.addf %418, %419 : vector<2x32xf32>
    %421 = math.tanh %420 : vector<2x32xf32>
    %422 = arith.mulf %417, %421 : vector<2x32xf32>
    %c0_199 = arith.constant 0 : index
    %c0_200 = arith.constant 0 : index
    %423 = vector.load %arg12[%c0_199, %c0_200] : memref<2x32xf32, #tpu.memory_space<vmem>>, vector<2x32xf32>
    tpu.vector_store %arg12[%c0_199, %c0_200], %422 {strides = array<i32>} : memref<2x32xf32, #tpu.memory_space<vmem>>, vector<2x32xf32>,
    %c0_201 = arith.constant 0 : index
    %c0_202 = arith.constant 0 : index
    %424 = vector.load %arg13[%c0_201, %c0_202] : memref<2x32xf32, #tpu.memory_space<vmem>>, vector<2x32xf32>
    tpu.vector_store %arg13[%c0_201, %c0_202], %420 {strides = array<i32>} : memref<2x32xf32, #tpu.memory_space<vmem>>, vector<2x32xf32>,
    %425 = vector.extract_strided_slice %422 {offsets = [1, 0], sizes = [1, 32], strides = [1, 1]} : vector<2x32xf32> to vector<1x32xf32>
    %426 = arith.index_cast %388 : i32 to index
    %c0_203 = arith.constant 0 : index
    %427 = vector.load %arg14[%426, %c0_203] : memref<8x32xf32, #tpu.memory_space<vmem>>, vector<1x32xf32>
    tpu.vector_store %arg14[%426, %c0_203], %425 {strides = array<i32>} : memref<8x32xf32, #tpu.memory_space<vmem>>, vector<1x32xf32>,
    %c2_i32_204 = arith.constant 2 : i32
    %c1_i32_205 = arith.constant 1 : i32
    %428 = arith.muli %c2_i32_204, %c1_i32_205 : i32
    %c0_i32_206 = arith.constant 0 : i32
    %429 = arith.addi %c0_i32_206, %428 : i32
    %c2_i32_207 = arith.constant 2 : i32
    %430 = arith.muli %429, %c2_i32_207 : i32
    %431 = tpu.assume_multiple %430, 2 : i32
    %c0_208 = arith.constant 0 : index
    %c0_209 = arith.constant 0 : index
    %432 = vector.load %arg12[%c0_208, %c0_209] : memref<2x32xf32, #tpu.memory_space<vmem>>, vector<2x32xf32>
    %c0_210 = arith.constant 0 : index
    %c0_211 = arith.constant 0 : index
    %433 = vector.load %arg13[%c0_210, %c0_211] : memref<2x32xf32, #tpu.memory_space<vmem>>, vector<2x32xf32>
    %434 = arith.index_cast %431 : i32 to index
    %c0_212 = arith.constant 0 : index
    %435 = vector.load %arg10[%434, %c0_212] : memref<16x128xf32, #tpu.memory_space<vmem>>, vector<2x128xf32>
    %436 = arith.truncf %432 : vector<2x32xf32> to vector<2x32xbf16>
    %cst_213 = arith.constant dense<0.000000e+00> : vector<2x128xf32>
    %437 = tpu.matmul %436, %334, %cst_213 {dimension_numbers = #tpu.dot_dimension_numbers<[1], [0], [0], [1], [0, 0, 1, 1], [], []>} : vector<2x32xbf16>, vector<32x128xbf16>, vector<2x128xf32> -> vector<2x128xf32>
    %438 = arith.addf %435, %437 : vector<2x128xf32>
    %439 = vector.extract_strided_slice %438 {offsets = [0, 0], sizes = [2, 32], strides = [1, 1]} : vector<2x128xf32> to vector<2x32xf32>
    %440 = arith.negf %439 : vector<2x32xf32>
    %441 = math.exp %440 : vector<2x32xf32>
    %cst_214 = arith.constant 1.000000e+00 : f32
    %442 = vector.broadcast %cst_214 : f32 to vector<2x32xf32>
    %443 = arith.addf %442, %441 : vector<2x32xf32>
    %444 = arith.divf %442, %443 : vector<2x32xf32>
    %445 = vector.extract_strided_slice %438 {offsets = [0, 32], sizes = [2, 32], strides = [1, 1]} : vector<2x128xf32> to vector<2x32xf32>
    %446 = arith.negf %445 : vector<2x32xf32>
    %447 = math.exp %446 : vector<2x32xf32>
    %cst_215 = arith.constant 1.000000e+00 : f32
    %448 = vector.broadcast %cst_215 : f32 to vector<2x32xf32>
    %449 = arith.addf %448, %447 : vector<2x32xf32>
    %450 = arith.divf %448, %449 : vector<2x32xf32>
    %451 = vector.extract_strided_slice %438 {offsets = [0, 64], sizes = [2, 32], strides = [1, 1]} : vector<2x128xf32> to vector<2x32xf32>
    %452 = math.tanh %451 : vector<2x32xf32>
    %453 = vector.extract_strided_slice %438 {offsets = [0, 96], sizes = [2, 32], strides = [1, 1]} : vector<2x128xf32> to vector<2x32xf32>
    %454 = arith.negf %453 : vector<2x32xf32>
    %455 = math.exp %454 : vector<2x32xf32>
    %cst_216 = arith.constant 1.000000e+00 : f32
    %456 = vector.broadcast %cst_216 : f32 to vector<2x32xf32>
    %457 = arith.addf %456, %455 : vector<2x32xf32>
    %458 = arith.divf %456, %457 : vector<2x32xf32>
    %459 = arith.mulf %450, %433 : vector<2x32xf32>
    %460 = arith.mulf %444, %452 : vector<2x32xf32>
    %461 = arith.addf %459, %460 : vector<2x32xf32>
    %462 = math.tanh %461 : vector<2x32xf32>
    %463 = arith.mulf %458, %462 : vector<2x32xf32>
    %c0_217 = arith.constant 0 : index
    %c0_218 = arith.constant 0 : index
    %464 = vector.load %arg12[%c0_217, %c0_218] : memref<2x32xf32, #tpu.memory_space<vmem>>, vector<2x32xf32>
    tpu.vector_store %arg12[%c0_217, %c0_218], %463 {strides = array<i32>} : memref<2x32xf32, #tpu.memory_space<vmem>>, vector<2x32xf32>,
    %c0_219 = arith.constant 0 : index
    %c0_220 = arith.constant 0 : index
    %465 = vector.load %arg13[%c0_219, %c0_220] : memref<2x32xf32, #tpu.memory_space<vmem>>, vector<2x32xf32>
    tpu.vector_store %arg13[%c0_219, %c0_220], %461 {strides = array<i32>} : memref<2x32xf32, #tpu.memory_space<vmem>>, vector<2x32xf32>,
    %466 = vector.extract_strided_slice %463 {offsets = [1, 0], sizes = [1, 32], strides = [1, 1]} : vector<2x32xf32> to vector<1x32xf32>
    %467 = arith.index_cast %429 : i32 to index
    %c0_221 = arith.constant 0 : index
    %468 = vector.load %arg14[%467, %c0_221] : memref<8x32xf32, #tpu.memory_space<vmem>>, vector<1x32xf32>
    tpu.vector_store %arg14[%467, %c0_221], %466 {strides = array<i32>} : memref<8x32xf32, #tpu.memory_space<vmem>>, vector<1x32xf32>,
    %c3_i32_222 = arith.constant 3 : i32
    %c1_i32_223 = arith.constant 1 : i32
    %469 = arith.muli %c3_i32_222, %c1_i32_223 : i32
    %c0_i32_224 = arith.constant 0 : i32
    %470 = arith.addi %c0_i32_224, %469 : i32
    %c2_i32_225 = arith.constant 2 : i32
    %471 = arith.muli %470, %c2_i32_225 : i32
    %472 = tpu.assume_multiple %471, 2 : i32
    %c0_226 = arith.constant 0 : index
    %c0_227 = arith.constant 0 : index
    %473 = vector.load %arg12[%c0_226, %c0_227] : memref<2x32xf32, #tpu.memory_space<vmem>>, vector<2x32xf32>
    %c0_228 = arith.constant 0 : index
    %c0_229 = arith.constant 0 : index
    %474 = vector.load %arg13[%c0_228, %c0_229] : memref<2x32xf32, #tpu.memory_space<vmem>>, vector<2x32xf32>
    %475 = arith.index_cast %472 : i32 to index
    %c0_230 = arith.constant 0 : index
    %476 = vector.load %arg10[%475, %c0_230] : memref<16x128xf32, #tpu.memory_space<vmem>>, vector<2x128xf32>
    %477 = arith.truncf %473 : vector<2x32xf32> to vector<2x32xbf16>
    %cst_231 = arith.constant dense<0.000000e+00> : vector<2x128xf32>
    %478 = tpu.matmul %477, %334, %cst_231 {dimension_numbers = #tpu.dot_dimension_numbers<[1], [0], [0], [1], [0, 0, 1, 1], [], []>} : vector<2x32xbf16>, vector<32x128xbf16>, vector<2x128xf32> -> vector<2x128xf32>
    %479 = arith.addf %476, %478 : vector<2x128xf32>
    %480 = vector.extract_strided_slice %479 {offsets = [0, 0], sizes = [2, 32], strides = [1, 1]} : vector<2x128xf32> to vector<2x32xf32>
    %481 = arith.negf %480 : vector<2x32xf32>
    %482 = math.exp %481 : vector<2x32xf32>
    %cst_232 = arith.constant 1.000000e+00 : f32
    %483 = vector.broadcast %cst_232 : f32 to vector<2x32xf32>
    %484 = arith.addf %483, %482 : vector<2x32xf32>
    %485 = arith.divf %483, %484 : vector<2x32xf32>
    %486 = vector.extract_strided_slice %479 {offsets = [0, 32], sizes = [2, 32], strides = [1, 1]} : vector<2x128xf32> to vector<2x32xf32>
    %487 = arith.negf %486 : vector<2x32xf32>
    %488 = math.exp %487 : vector<2x32xf32>
    %cst_233 = arith.constant 1.000000e+00 : f32
    %489 = vector.broadcast %cst_233 : f32 to vector<2x32xf32>
    %490 = arith.addf %489, %488 : vector<2x32xf32>
    %491 = arith.divf %489, %490 : vector<2x32xf32>
    %492 = vector.extract_strided_slice %479 {offsets = [0, 64], sizes = [2, 32], strides = [1, 1]} : vector<2x128xf32> to vector<2x32xf32>
    %493 = math.tanh %492 : vector<2x32xf32>
    %494 = vector.extract_strided_slice %479 {offsets = [0, 96], sizes = [2, 32], strides = [1, 1]} : vector<2x128xf32> to vector<2x32xf32>
    %495 = arith.negf %494 : vector<2x32xf32>
    %496 = math.exp %495 : vector<2x32xf32>
    %cst_234 = arith.constant 1.000000e+00 : f32
    %497 = vector.broadcast %cst_234 : f32 to vector<2x32xf32>
    %498 = arith.addf %497, %496 : vector<2x32xf32>
    %499 = arith.divf %497, %498 : vector<2x32xf32>
    %500 = arith.mulf %491, %474 : vector<2x32xf32>
    %501 = arith.mulf %485, %493 : vector<2x32xf32>
    %502 = arith.addf %500, %501 : vector<2x32xf32>
    %503 = math.tanh %502 : vector<2x32xf32>
    %504 = arith.mulf %499, %503 : vector<2x32xf32>
    %c0_235 = arith.constant 0 : index
    %c0_236 = arith.constant 0 : index
    %505 = vector.load %arg12[%c0_235, %c0_236] : memref<2x32xf32, #tpu.memory_space<vmem>>, vector<2x32xf32>
    tpu.vector_store %arg12[%c0_235, %c0_236], %504 {strides = array<i32>} : memref<2x32xf32, #tpu.memory_space<vmem>>, vector<2x32xf32>,
    %c0_237 = arith.constant 0 : index
    %c0_238 = arith.constant 0 : index
    %506 = vector.load %arg13[%c0_237, %c0_238] : memref<2x32xf32, #tpu.memory_space<vmem>>, vector<2x32xf32>
    tpu.vector_store %arg13[%c0_237, %c0_238], %502 {strides = array<i32>} : memref<2x32xf32, #tpu.memory_space<vmem>>, vector<2x32xf32>,
    %507 = vector.extract_strided_slice %504 {offsets = [1, 0], sizes = [1, 32], strides = [1, 1]} : vector<2x32xf32> to vector<1x32xf32>
    %508 = arith.index_cast %470 : i32 to index
    %c0_239 = arith.constant 0 : index
    %509 = vector.load %arg14[%508, %c0_239] : memref<8x32xf32, #tpu.memory_space<vmem>>, vector<1x32xf32>
    tpu.vector_store %arg14[%508, %c0_239], %507 {strides = array<i32>} : memref<8x32xf32, #tpu.memory_space<vmem>>, vector<1x32xf32>,
    %c4_i32_240 = arith.constant 4 : i32
    %c1_i32_241 = arith.constant 1 : i32
    %510 = arith.muli %c4_i32_240, %c1_i32_241 : i32
    %c0_i32_242 = arith.constant 0 : i32
    %511 = arith.addi %c0_i32_242, %510 : i32
    %c2_i32_243 = arith.constant 2 : i32
    %512 = arith.muli %511, %c2_i32_243 : i32
    %513 = tpu.assume_multiple %512, 2 : i32
    %c0_244 = arith.constant 0 : index
    %c0_245 = arith.constant 0 : index
    %514 = vector.load %arg12[%c0_244, %c0_245] : memref<2x32xf32, #tpu.memory_space<vmem>>, vector<2x32xf32>
    %c0_246 = arith.constant 0 : index
    %c0_247 = arith.constant 0 : index
    %515 = vector.load %arg13[%c0_246, %c0_247] : memref<2x32xf32, #tpu.memory_space<vmem>>, vector<2x32xf32>
    %516 = arith.index_cast %513 : i32 to index
    %c0_248 = arith.constant 0 : index
    %517 = vector.load %arg10[%516, %c0_248] : memref<16x128xf32, #tpu.memory_space<vmem>>, vector<2x128xf32>
    %518 = arith.truncf %514 : vector<2x32xf32> to vector<2x32xbf16>
    %cst_249 = arith.constant dense<0.000000e+00> : vector<2x128xf32>
    %519 = tpu.matmul %518, %334, %cst_249 {dimension_numbers = #tpu.dot_dimension_numbers<[1], [0], [0], [1], [0, 0, 1, 1], [], []>} : vector<2x32xbf16>, vector<32x128xbf16>, vector<2x128xf32> -> vector<2x128xf32>
    %520 = arith.addf %517, %519 : vector<2x128xf32>
    %521 = vector.extract_strided_slice %520 {offsets = [0, 0], sizes = [2, 32], strides = [1, 1]} : vector<2x128xf32> to vector<2x32xf32>
    %522 = arith.negf %521 : vector<2x32xf32>
    %523 = math.exp %522 : vector<2x32xf32>
    %cst_250 = arith.constant 1.000000e+00 : f32
    %524 = vector.broadcast %cst_250 : f32 to vector<2x32xf32>
    %525 = arith.addf %524, %523 : vector<2x32xf32>
    %526 = arith.divf %524, %525 : vector<2x32xf32>
    %527 = vector.extract_strided_slice %520 {offsets = [0, 32], sizes = [2, 32], strides = [1, 1]} : vector<2x128xf32> to vector<2x32xf32>
    %528 = arith.negf %527 : vector<2x32xf32>
    %529 = math.exp %528 : vector<2x32xf32>
    %cst_251 = arith.constant 1.000000e+00 : f32
    %530 = vector.broadcast %cst_251 : f32 to vector<2x32xf32>
    %531 = arith.addf %530, %529 : vector<2x32xf32>
    %532 = arith.divf %530, %531 : vector<2x32xf32>
    %533 = vector.extract_strided_slice %520 {offsets = [0, 64], sizes = [2, 32], strides = [1, 1]} : vector<2x128xf32> to vector<2x32xf32>
    %534 = math.tanh %533 : vector<2x32xf32>
    %535 = vector.extract_strided_slice %520 {offsets = [0, 96], sizes = [2, 32], strides = [1, 1]} : vector<2x128xf32> to vector<2x32xf32>
    %536 = arith.negf %535 : vector<2x32xf32>
    %537 = math.exp %536 : vector<2x32xf32>
    %cst_252 = arith.constant 1.000000e+00 : f32
    %538 = vector.broadcast %cst_252 : f32 to vector<2x32xf32>
    %539 = arith.addf %538, %537 : vector<2x32xf32>
    %540 = arith.divf %538, %539 : vector<2x32xf32>
    %541 = arith.mulf %532, %515 : vector<2x32xf32>
    %542 = arith.mulf %526, %534 : vector<2x32xf32>
    %543 = arith.addf %541, %542 : vector<2x32xf32>
    %544 = math.tanh %543 : vector<2x32xf32>
    %545 = arith.mulf %540, %544 : vector<2x32xf32>
    %c0_253 = arith.constant 0 : index
    %c0_254 = arith.constant 0 : index
    %546 = vector.load %arg12[%c0_253, %c0_254] : memref<2x32xf32, #tpu.memory_space<vmem>>, vector<2x32xf32>
    tpu.vector_store %arg12[%c0_253, %c0_254], %545 {strides = array<i32>} : memref<2x32xf32, #tpu.memory_space<vmem>>, vector<2x32xf32>,
    %c0_255 = arith.constant 0 : index
    %c0_256 = arith.constant 0 : index
    %547 = vector.load %arg13[%c0_255, %c0_256] : memref<2x32xf32, #tpu.memory_space<vmem>>, vector<2x32xf32>
    tpu.vector_store %arg13[%c0_255, %c0_256], %543 {strides = array<i32>} : memref<2x32xf32, #tpu.memory_space<vmem>>, vector<2x32xf32>,
    %548 = vector.extract_strided_slice %545 {offsets = [1, 0], sizes = [1, 32], strides = [1, 1]} : vector<2x32xf32> to vector<1x32xf32>
    %549 = arith.index_cast %511 : i32 to index
    %c0_257 = arith.constant 0 : index
    %550 = vector.load %arg14[%549, %c0_257] : memref<8x32xf32, #tpu.memory_space<vmem>>, vector<1x32xf32>
    tpu.vector_store %arg14[%549, %c0_257], %548 {strides = array<i32>} : memref<8x32xf32, #tpu.memory_space<vmem>>, vector<1x32xf32>,
    %c5_i32_258 = arith.constant 5 : i32
    %c1_i32_259 = arith.constant 1 : i32
    %551 = arith.muli %c5_i32_258, %c1_i32_259 : i32
    %c0_i32_260 = arith.constant 0 : i32
    %552 = arith.addi %c0_i32_260, %551 : i32
    %c2_i32_261 = arith.constant 2 : i32
    %553 = arith.muli %552, %c2_i32_261 : i32
    %554 = tpu.assume_multiple %553, 2 : i32
    %c0_262 = arith.constant 0 : index
    %c0_263 = arith.constant 0 : index
    %555 = vector.load %arg12[%c0_262, %c0_263] : memref<2x32xf32, #tpu.memory_space<vmem>>, vector<2x32xf32>
    %c0_264 = arith.constant 0 : index
    %c0_265 = arith.constant 0 : index
    %556 = vector.load %arg13[%c0_264, %c0_265] : memref<2x32xf32, #tpu.memory_space<vmem>>, vector<2x32xf32>
    %557 = arith.index_cast %554 : i32 to index
    %c0_266 = arith.constant 0 : index
    %558 = vector.load %arg10[%557, %c0_266] : memref<16x128xf32, #tpu.memory_space<vmem>>, vector<2x128xf32>
    %559 = arith.truncf %555 : vector<2x32xf32> to vector<2x32xbf16>
    %cst_267 = arith.constant dense<0.000000e+00> : vector<2x128xf32>
    %560 = tpu.matmul %559, %334, %cst_267 {dimension_numbers = #tpu.dot_dimension_numbers<[1], [0], [0], [1], [0, 0, 1, 1], [], []>} : vector<2x32xbf16>, vector<32x128xbf16>, vector<2x128xf32> -> vector<2x128xf32>
    %561 = arith.addf %558, %560 : vector<2x128xf32>
    %562 = vector.extract_strided_slice %561 {offsets = [0, 0], sizes = [2, 32], strides = [1, 1]} : vector<2x128xf32> to vector<2x32xf32>
    %563 = arith.negf %562 : vector<2x32xf32>
    %564 = math.exp %563 : vector<2x32xf32>
    %cst_268 = arith.constant 1.000000e+00 : f32
    %565 = vector.broadcast %cst_268 : f32 to vector<2x32xf32>
    %566 = arith.addf %565, %564 : vector<2x32xf32>
    %567 = arith.divf %565, %566 : vector<2x32xf32>
    %568 = vector.extract_strided_slice %561 {offsets = [0, 32], sizes = [2, 32], strides = [1, 1]} : vector<2x128xf32> to vector<2x32xf32>
    %569 = arith.negf %568 : vector<2x32xf32>
    %570 = math.exp %569 : vector<2x32xf32>
    %cst_269 = arith.constant 1.000000e+00 : f32
    %571 = vector.broadcast %cst_269 : f32 to vector<2x32xf32>
    %572 = arith.addf %571, %570 : vector<2x32xf32>
    %573 = arith.divf %571, %572 : vector<2x32xf32>
    %574 = vector.extract_strided_slice %561 {offsets = [0, 64], sizes = [2, 32], strides = [1, 1]} : vector<2x128xf32> to vector<2x32xf32>
    %575 = math.tanh %574 : vector<2x32xf32>
    %576 = vector.extract_strided_slice %561 {offsets = [0, 96], sizes = [2, 32], strides = [1, 1]} : vector<2x128xf32> to vector<2x32xf32>
    %577 = arith.negf %576 : vector<2x32xf32>
    %578 = math.exp %577 : vector<2x32xf32>
    %cst_270 = arith.constant 1.000000e+00 : f32
    %579 = vector.broadcast %cst_270 : f32 to vector<2x32xf32>
    %580 = arith.addf %579, %578 : vector<2x32xf32>
    %581 = arith.divf %579, %580 : vector<2x32xf32>
    %582 = arith.mulf %573, %556 : vector<2x32xf32>
    %583 = arith.mulf %567, %575 : vector<2x32xf32>
    %584 = arith.addf %582, %583 : vector<2x32xf32>
    %585 = math.tanh %584 : vector<2x32xf32>
    %586 = arith.mulf %581, %585 : vector<2x32xf32>
    %c0_271 = arith.constant 0 : index
    %c0_272 = arith.constant 0 : index
    %587 = vector.load %arg12[%c0_271, %c0_272] : memref<2x32xf32, #tpu.memory_space<vmem>>, vector<2x32xf32>
    tpu.vector_store %arg12[%c0_271, %c0_272], %586 {strides = array<i32>} : memref<2x32xf32, #tpu.memory_space<vmem>>, vector<2x32xf32>,
    %c0_273 = arith.constant 0 : index
    %c0_274 = arith.constant 0 : index
    %588 = vector.load %arg13[%c0_273, %c0_274] : memref<2x32xf32, #tpu.memory_space<vmem>>, vector<2x32xf32>
    tpu.vector_store %arg13[%c0_273, %c0_274], %584 {strides = array<i32>} : memref<2x32xf32, #tpu.memory_space<vmem>>, vector<2x32xf32>,
    %589 = vector.extract_strided_slice %586 {offsets = [1, 0], sizes = [1, 32], strides = [1, 1]} : vector<2x32xf32> to vector<1x32xf32>
    %590 = arith.index_cast %552 : i32 to index
    %c0_275 = arith.constant 0 : index
    %591 = vector.load %arg14[%590, %c0_275] : memref<8x32xf32, #tpu.memory_space<vmem>>, vector<1x32xf32>
    tpu.vector_store %arg14[%590, %c0_275], %589 {strides = array<i32>} : memref<8x32xf32, #tpu.memory_space<vmem>>, vector<1x32xf32>,
    %c6_i32_276 = arith.constant 6 : i32
    %c1_i32_277 = arith.constant 1 : i32
    %592 = arith.muli %c6_i32_276, %c1_i32_277 : i32
    %c0_i32_278 = arith.constant 0 : i32
    %593 = arith.addi %c0_i32_278, %592 : i32
    %c2_i32_279 = arith.constant 2 : i32
    %594 = arith.muli %593, %c2_i32_279 : i32
    %595 = tpu.assume_multiple %594, 2 : i32
    %c0_280 = arith.constant 0 : index
    %c0_281 = arith.constant 0 : index
    %596 = vector.load %arg12[%c0_280, %c0_281] : memref<2x32xf32, #tpu.memory_space<vmem>>, vector<2x32xf32>
    %c0_282 = arith.constant 0 : index
    %c0_283 = arith.constant 0 : index
    %597 = vector.load %arg13[%c0_282, %c0_283] : memref<2x32xf32, #tpu.memory_space<vmem>>, vector<2x32xf32>
    %598 = arith.index_cast %595 : i32 to index
    %c0_284 = arith.constant 0 : index
    %599 = vector.load %arg10[%598, %c0_284] : memref<16x128xf32, #tpu.memory_space<vmem>>, vector<2x128xf32>
    %600 = arith.truncf %596 : vector<2x32xf32> to vector<2x32xbf16>
    %cst_285 = arith.constant dense<0.000000e+00> : vector<2x128xf32>
    %601 = tpu.matmul %600, %334, %cst_285 {dimension_numbers = #tpu.dot_dimension_numbers<[1], [0], [0], [1], [0, 0, 1, 1], [], []>} : vector<2x32xbf16>, vector<32x128xbf16>, vector<2x128xf32> -> vector<2x128xf32>
    %602 = arith.addf %599, %601 : vector<2x128xf32>
    %603 = vector.extract_strided_slice %602 {offsets = [0, 0], sizes = [2, 32], strides = [1, 1]} : vector<2x128xf32> to vector<2x32xf32>
    %604 = arith.negf %603 : vector<2x32xf32>
    %605 = math.exp %604 : vector<2x32xf32>
    %cst_286 = arith.constant 1.000000e+00 : f32
    %606 = vector.broadcast %cst_286 : f32 to vector<2x32xf32>
    %607 = arith.addf %606, %605 : vector<2x32xf32>
    %608 = arith.divf %606, %607 : vector<2x32xf32>
    %609 = vector.extract_strided_slice %602 {offsets = [0, 32], sizes = [2, 32], strides = [1, 1]} : vector<2x128xf32> to vector<2x32xf32>
    %610 = arith.negf %609 : vector<2x32xf32>
    %611 = math.exp %610 : vector<2x32xf32>
    %cst_287 = arith.constant 1.000000e+00 : f32
    %612 = vector.broadcast %cst_287 : f32 to vector<2x32xf32>
    %613 = arith.addf %612, %611 : vector<2x32xf32>
    %614 = arith.divf %612, %613 : vector<2x32xf32>
    %615 = vector.extract_strided_slice %602 {offsets = [0, 64], sizes = [2, 32], strides = [1, 1]} : vector<2x128xf32> to vector<2x32xf32>
    %616 = math.tanh %615 : vector<2x32xf32>
    %617 = vector.extract_strided_slice %602 {offsets = [0, 96], sizes = [2, 32], strides = [1, 1]} : vector<2x128xf32> to vector<2x32xf32>
    %618 = arith.negf %617 : vector<2x32xf32>
    %619 = math.exp %618 : vector<2x32xf32>
    %cst_288 = arith.constant 1.000000e+00 : f32
    %620 = vector.broadcast %cst_288 : f32 to vector<2x32xf32>
    %621 = arith.addf %620, %619 : vector<2x32xf32>
    %622 = arith.divf %620, %621 : vector<2x32xf32>
    %623 = arith.mulf %614, %597 : vector<2x32xf32>
    %624 = arith.mulf %608, %616 : vector<2x32xf32>
    %625 = arith.addf %623, %624 : vector<2x32xf32>
    %626 = math.tanh %625 : vector<2x32xf32>
    %627 = arith.mulf %622, %626 : vector<2x32xf32>
    %c0_289 = arith.constant 0 : index
    %c0_290 = arith.constant 0 : index
    %628 = vector.load %arg12[%c0_289, %c0_290] : memref<2x32xf32, #tpu.memory_space<vmem>>, vector<2x32xf32>
    tpu.vector_store %arg12[%c0_289, %c0_290], %627 {strides = array<i32>} : memref<2x32xf32, #tpu.memory_space<vmem>>, vector<2x32xf32>,
    %c0_291 = arith.constant 0 : index
    %c0_292 = arith.constant 0 : index
    %629 = vector.load %arg13[%c0_291, %c0_292] : memref<2x32xf32, #tpu.memory_space<vmem>>, vector<2x32xf32>
    tpu.vector_store %arg13[%c0_291, %c0_292], %625 {strides = array<i32>} : memref<2x32xf32, #tpu.memory_space<vmem>>, vector<2x32xf32>,
    %630 = vector.extract_strided_slice %627 {offsets = [1, 0], sizes = [1, 32], strides = [1, 1]} : vector<2x32xf32> to vector<1x32xf32>
    %631 = arith.index_cast %593 : i32 to index
    %c0_293 = arith.constant 0 : index
    %632 = vector.load %arg14[%631, %c0_293] : memref<8x32xf32, #tpu.memory_space<vmem>>, vector<1x32xf32>
    tpu.vector_store %arg14[%631, %c0_293], %630 {strides = array<i32>} : memref<8x32xf32, #tpu.memory_space<vmem>>, vector<1x32xf32>,
    %c7_i32_294 = arith.constant 7 : i32
    %c1_i32_295 = arith.constant 1 : i32
    %633 = arith.muli %c7_i32_294, %c1_i32_295 : i32
    %c0_i32_296 = arith.constant 0 : i32
    %634 = arith.addi %c0_i32_296, %633 : i32
    %c2_i32_297 = arith.constant 2 : i32
    %635 = arith.muli %634, %c2_i32_297 : i32
    %636 = tpu.assume_multiple %635, 2 : i32
    %c0_298 = arith.constant 0 : index
    %c0_299 = arith.constant 0 : index
    %637 = vector.load %arg12[%c0_298, %c0_299] : memref<2x32xf32, #tpu.memory_space<vmem>>, vector<2x32xf32>
    %c0_300 = arith.constant 0 : index
    %c0_301 = arith.constant 0 : index
    %638 = vector.load %arg13[%c0_300, %c0_301] : memref<2x32xf32, #tpu.memory_space<vmem>>, vector<2x32xf32>
    %639 = arith.index_cast %636 : i32 to index
    %c0_302 = arith.constant 0 : index
    %640 = vector.load %arg10[%639, %c0_302] : memref<16x128xf32, #tpu.memory_space<vmem>>, vector<2x128xf32>
    %641 = arith.truncf %637 : vector<2x32xf32> to vector<2x32xbf16>
    %cst_303 = arith.constant dense<0.000000e+00> : vector<2x128xf32>
    %642 = tpu.matmul %641, %334, %cst_303 {dimension_numbers = #tpu.dot_dimension_numbers<[1], [0], [0], [1], [0, 0, 1, 1], [], []>} : vector<2x32xbf16>, vector<32x128xbf16>, vector<2x128xf32> -> vector<2x128xf32>
    %643 = arith.addf %640, %642 : vector<2x128xf32>
    %644 = vector.extract_strided_slice %643 {offsets = [0, 0], sizes = [2, 32], strides = [1, 1]} : vector<2x128xf32> to vector<2x32xf32>
    %645 = arith.negf %644 : vector<2x32xf32>
    %646 = math.exp %645 : vector<2x32xf32>
    %cst_304 = arith.constant 1.000000e+00 : f32
    %647 = vector.broadcast %cst_304 : f32 to vector<2x32xf32>
    %648 = arith.addf %647, %646 : vector<2x32xf32>
    %649 = arith.divf %647, %648 : vector<2x32xf32>
    %650 = vector.extract_strided_slice %643 {offsets = [0, 32], sizes = [2, 32], strides = [1, 1]} : vector<2x128xf32> to vector<2x32xf32>
    %651 = arith.negf %650 : vector<2x32xf32>
    %652 = math.exp %651 : vector<2x32xf32>
    %cst_305 = arith.constant 1.000000e+00 : f32
    %653 = vector.broadcast %cst_305 : f32 to vector<2x32xf32>
    %654 = arith.addf %653, %652 : vector<2x32xf32>
    %655 = arith.divf %653, %654 : vector<2x32xf32>
    %656 = vector.extract_strided_slice %643 {offsets = [0, 64], sizes = [2, 32], strides = [1, 1]} : vector<2x128xf32> to vector<2x32xf32>
    %657 = math.tanh %656 : vector<2x32xf32>
    %658 = vector.extract_strided_slice %643 {offsets = [0, 96], sizes = [2, 32], strides = [1, 1]} : vector<2x128xf32> to vector<2x32xf32>
    %659 = arith.negf %658 : vector<2x32xf32>
    %660 = math.exp %659 : vector<2x32xf32>
    %cst_306 = arith.constant 1.000000e+00 : f32
    %661 = vector.broadcast %cst_306 : f32 to vector<2x32xf32>
    %662 = arith.addf %661, %660 : vector<2x32xf32>
    %663 = arith.divf %661, %662 : vector<2x32xf32>
    %664 = arith.mulf %655, %638 : vector<2x32xf32>
    %665 = arith.mulf %649, %657 : vector<2x32xf32>
    %666 = arith.addf %664, %665 : vector<2x32xf32>
    %667 = math.tanh %666 : vector<2x32xf32>
    %668 = arith.mulf %663, %667 : vector<2x32xf32>
    %c0_307 = arith.constant 0 : index
    %c0_308 = arith.constant 0 : index
    %669 = vector.load %arg12[%c0_307, %c0_308] : memref<2x32xf32, #tpu.memory_space<vmem>>, vector<2x32xf32>
    tpu.vector_store %arg12[%c0_307, %c0_308], %668 {strides = array<i32>} : memref<2x32xf32, #tpu.memory_space<vmem>>, vector<2x32xf32>,
    %c0_309 = arith.constant 0 : index
    %c0_310 = arith.constant 0 : index
    %670 = vector.load %arg13[%c0_309, %c0_310] : memref<2x32xf32, #tpu.memory_space<vmem>>, vector<2x32xf32>
    tpu.vector_store %arg13[%c0_309, %c0_310], %666 {strides = array<i32>} : memref<2x32xf32, #tpu.memory_space<vmem>>, vector<2x32xf32>,
    %671 = vector.extract_strided_slice %668 {offsets = [1, 0], sizes = [1, 32], strides = [1, 1]} : vector<2x32xf32> to vector<1x32xf32>
    %672 = arith.index_cast %634 : i32 to index
    %c0_311 = arith.constant 0 : index
    %673 = vector.load %arg14[%672, %c0_311] : memref<8x32xf32, #tpu.memory_space<vmem>>, vector<1x32xf32>
    tpu.vector_store %arg14[%672, %c0_311], %671 {strides = array<i32>} : memref<8x32xf32, #tpu.memory_space<vmem>>, vector<1x32xf32>,
    %c8_i32_312 = arith.constant 8 : i32
    %c0_313 = arith.constant 0 : index
    %c0_314 = arith.constant 0 : index
    %674 = vector.load %arg14[%c0_313, %c0_314] : memref<8x32xf32, #tpu.memory_space<vmem>>, vector<8x32xf32>
    %c0_315 = arith.constant 0 : index
    %c0_316 = arith.constant 0 : index
    %675 = vector.load %arg7[%c0_315, %c0_316] : memref<32x2xf32, #tpu.memory_space<vmem>>, vector<32x2xf32>
    %cst_317 = arith.constant dense<0.000000e+00> : vector<8x2xf32>
    %676 = tpu.matmul %674, %675, %cst_317 {dimension_numbers = #tpu.dot_dimension_numbers<[1], [0], [0], [1], [0, 0, 1, 1], [], []>} : vector<8x32xf32>, vector<32x2xf32>, vector<8x2xf32> -> vector<8x2xf32>
    %c0_318 = arith.constant 0 : index
    %c0_319 = arith.constant 0 : index
    %677 = vector.load %arg8[%c0_318, %c0_319] : memref<1x2xf32, #tpu.memory_space<vmem>>, vector<1x2xf32>
    %678 = vector.broadcast %677 : vector<1x2xf32> to vector<8x2xf32>
    %679 = arith.addf %676, %678 : vector<8x2xf32>
    %680 = arith.negf %679 : vector<8x2xf32>
    %681 = math.exp %680 : vector<8x2xf32>
    %cst_320 = arith.constant 1.000000e+00 : f32
    %682 = vector.broadcast %cst_320 : f32 to vector<8x2xf32>
    %683 = arith.addf %682, %681 : vector<8x2xf32>
    %684 = arith.divf %682, %683 : vector<8x2xf32>
    %c0_321 = arith.constant 0 : index
    %c0_322 = arith.constant 0 : index
    %685 = vector.load %arg9[%c0_321, %c0_322] : memref<8x2xf32, #tpu.memory_space<vmem>>, vector<8x2xf32>
    tpu.vector_store %arg9[%c0_321, %c0_322], %684 {strides = array<i32>} : memref<8x2xf32, #tpu.memory_space<vmem>>, vector<8x2xf32>,
    return
  }
}

</mosaic_0001>

<llo_original>
// kernel: lstm_module_forward.1
$region0: #{lstm_module_forward.1}
  #allocation0 [shape = 'u32[]', space=smem, size = 0x4, offset = 0x4, fixed_abs, tag = 'smem constant byte address 0x4 - core index']
  #allocation1 [shape = 'u32[72,128]{1,0:T(1,128)}', space=vmem, size = 0x9000, scoped, tag = 'internal scratch']
  #allocation2 [shape = 'f32[16,128]{1,0:T(8,128)}', space=vmem, size = 0x2000, scoped, tag = 'scratch operand']
  #allocation3 [shape = 'f32[16,32]{1,0:T(8,128)}', space=vmem, size = 0x2000, scoped, tag = 'scratch operand']
  #allocation4 [shape = 'f32[2,32]{1,0:T(2,128)}', space=vmem, size = 0x400, scoped, tag = 'scratch operand']
  #allocation5 [shape = 'f32[2,32]{1,0:T(2,128)}', space=vmem, size = 0x400, scoped, tag = 'scratch operand']
  #allocation6 [shape = 'f32[8,32]{1,0:T(8,128)}', space=vmem, size = 0x1000, scoped, tag = 'scratch operand']
  %s0 = inlined_call_operand.vmem [shape: f32[16,4], index: 0, kind: input, shape index: {}]
  %s1 = inlined_call_operand.vmem [shape: bf16[4,128], index: 1, kind: input, shape index: {}]
  %s2 = inlined_call_operand.vmem [shape: bf16[32,128], index: 2, kind: input, shape index: {}]
  %s3 = inlined_call_operand.vmem [shape: f32[1,128], index: 3, kind: input, shape index: {}]
  %s4 = inlined_call_operand.vmem [shape: bf16[32,128], index: 4, kind: input, shape index: {}]
  %s5 = inlined_call_operand.vmem [shape: bf16[32,128], index: 5, kind: input, shape index: {}]
  %s6 = inlined_call_operand.vmem [shape: f32[1,128], index: 6, kind: input, shape index: {}]
  %s7 = inlined_call_operand.vmem [shape: f32[32,2], index: 7, kind: input, shape index: {}]
  %s8 = inlined_call_operand.vmem [shape: f32[1,2], index: 8, kind: input, shape index: {}]
  %s9 = inlined_call_operand.vmem [shape: f32[8,2], index: 9, kind: output, shape index: {}]
  %s10 = sld [smem:[#allocation0]]
  $region46: #{lstm_module_forward.1} parent=0
    _
  %s12 = ssub.s32 1, %s10
  %s13 = scalar_select 0, %s12, %s10
  // Predicated region
  $region2: #{lstm_module_forward.1} parent=0 // pred_check
    _
  $region3: #{lstm_module_forward.1} parent=0 // pred_check_branch
    %15 = sbr.rel (0) target = $region5
  $region4: #{lstm_module_forward.1} parent=0 // pred_region
    _
  $region5: #{lstm_module_forward.1} parent=0 // pred_fallthru
    _
  // Predicated region
  $region6: #{lstm_module_forward.1} parent=0 // pred_check
    _
  $region7: #{lstm_module_forward.1} parent=0 // pred_check_branch
    %17 = sbr.rel (0) target = $region9
  $region8: #{lstm_module_forward.1} parent=0 // pred_region
    _
  $region9: #{lstm_module_forward.1} parent=0 // pred_fallthru
    _
  // Predicated region
  $region10: #{lstm_module_forward.1} parent=0 // pred_check
    _
  $region11: #{lstm_module_forward.1} parent=0 // pred_check_branch
    %19 = sbr.rel (0) target = $region13
  $region12: #{lstm_module_forward.1} parent=0 // pred_region
    _
  $region13: #{lstm_module_forward.1} parent=0 // pred_fallthru
    _
  // Predicated region
  $region14: #{lstm_module_forward.1} parent=0 // pred_check
    _
  $region15: #{lstm_module_forward.1} parent=0 // pred_check_branch
    %21 = sbr.rel (0) target = $region17
  $region16: #{lstm_module_forward.1} parent=0 // pred_region
    _
  $region17: #{lstm_module_forward.1} parent=0 // pred_fallthru
    _
  // Predicated region
  $region18: #{lstm_module_forward.1} parent=0 // pred_check
    _
  $region19: #{lstm_module_forward.1} parent=0 // pred_check_branch
    %23 = sbr.rel (0) target = $region21
  $region20: #{lstm_module_forward.1} parent=0 // pred_region
    _
  $region21: #{lstm_module_forward.1} parent=0 // pred_fallthru
    _
  // Predicated region
  $region22: #{lstm_module_forward.1} parent=0 // pred_check
    _
  $region23: #{lstm_module_forward.1} parent=0 // pred_check_branch
    %25 = sbr.rel (0) target = $region25
  $region24: #{lstm_module_forward.1} parent=0 // pred_region
    _
  $region25: #{lstm_module_forward.1} parent=0 // pred_fallthru
    _
  // Predicated region
  $region26: #{lstm_module_forward.1} parent=0 // pred_check
    _
  $region27: #{lstm_module_forward.1} parent=0 // pred_check_branch
    %27 = sbr.rel (0) target = $region29
  $region28: #{lstm_module_forward.1} parent=0 // pred_region
    _
  $region29: #{lstm_module_forward.1} parent=0 // pred_fallthru
    _
  // Predicated region
  $region30: #{lstm_module_forward.1} parent=0 // pred_check
    _
  $region31: #{lstm_module_forward.1} parent=0 // pred_check_branch
    %29 = sbr.rel (0) target = $region33
  $region32: #{lstm_module_forward.1} parent=0 // pred_region
    _
  $region33: #{lstm_module_forward.1} parent=0 // pred_fallthru
    _
  // Predicated region
  $region34: #{lstm_module_forward.1} parent=0 // pred_check
    _
  $region35: #{lstm_module_forward.1} parent=0 // pred_check_branch
    %31 = sbr.rel (0) target = $region37
  $region36: #{lstm_module_forward.1} parent=0 // pred_region
    _
  $region37: #{lstm_module_forward.1} parent=0 // pred_fallthru
    _
  %v33 = vld [vmem:[%s1] sm:$0x3]
  %v34 = vld [vmem:[%s2] sm:$0xf]
  %v35 = vld [vmem:[%s2 + $0x4] sm:$0xf]
  %v36 = vld [vmem:[%s2 + $0x8] sm:$0xf]
  %v37 = vld [vmem:[%s2 + $0xc] sm:$0xf]
  %v38 = vld [vmem:[%s3] sm:$0x1]
  %v39 = vld [vmem:[%s0] sm:$0xff]
  %v40 = vld [vmem:[%s0 + $0x8] sm:$0xff]
  %v41 = vpack.c.bf16 %v40, %v39
  %v43 = vperm.slane %v38, 0
  %vm45 = vcmask 31744
  %v47 = vsel %vm45, %v41, 0
  %vm49 = vcmask 1041408
  %v51 = vsel %vm49, %v33, 0
  %53 = vmatpush.bf16.msra.mxu0 0
  %54 = vmatpush.bf16.msra.mxu0 0
  %55 = vmatpush.bf16.msra.mxu0 0
  %56 = vmatpush.bf16.msra.mxu0 0
  %57 = vmatpush.bf16.msra.mxu0 0
  %58 = vmatpush.bf16.msra.mxu0 0
  %59 = vmatpush.bf16.msra.mxu0 0
  %60 = vmatpush.bf16.msra.mxu0 %v51
  %61 = vmatmul.bf16.gmra.mxu0 %v47
  %v62 = vpop.f32.mrf.mxu0
  %v63 = vadd.f32 %v43, %v62
  %v64 = vpop.f32.mrf.mxu0
  %v65 = vadd.f32 %v43, %v64
  %66 = vdwg.mxu0
  %67 = vst [vmem:[#allocation2] sm:$0xff] %v63
  %68 = vst [vmem:[#allocation2 + $0x8] sm:$0xff] %v65
  %vm69 = vcmask 254976
  %70 = vst.msk [vmem:[#allocation4] sm:$0x3] %vm69, 0.0
  %71 = vst.msk [vmem:[#allocation5] sm:$0x3] %vm69, 0.0
  %v72 = vld [vmem:[#allocation4] sm:$0x3]
  %v73 = vld [vmem:[#allocation5] sm:$0x3]
  %v74 = vld [vmem:[#allocation2] sm:$0x3]
  %v75 = vpack.c.bf16 %v72, %v72
  %v80 = vunpack.c.l.b16 %v34
  %v81 = vunpack.c.l.b16 %v35
  %v82 = vunpack.c.l.b16 %v36
  %v83 = vunpack.c.l.b16 %v37
  %v84 = vpack.c.b16 %v81, %v80
  %v85 = vpack.c.b16 %v83, %v82
  %vm88 = vcmask 261120
  %v90 = vsel %vm88, %v75, 0
  %92 = vmatpush.bf16.msra.mxu0 0
  %93 = vmatpush.bf16.msra.mxu0 0
  %94 = vmatpush.bf16.msra.mxu0 0
  %95 = vmatpush.bf16.msra.mxu0 0
  %96 = vmatpush.bf16.msra.mxu0 0
  %97 = vmatpush.bf16.msra.mxu0 0
  %98 = vmatpush.bf16.msra.mxu0 %v85
  %99 = vmatpush.bf16.msra.mxu0 %v84
  %100 = vmatmul.bf16.gmra.mxu0 %v90
  %v101 = vpop.f32.mrf.mxu0
  %v102 = vadd.f32 0.0, %v101
  %v103 = vpop.f32.mrf.mxu0
  %104 = vdwg.mxu0
  %v105 = vadd.f32 %v74, %v102
  %v106 = vxor.u32 %v105, 2147483648
  %v107 = vmul.f32 %v106, 1.442695
  %v108 = vpow.pop %v107
  %v109 = vadd.f32 %v108, 1.0
  %v110 = vrcp.pop %v109
  %v111 = vmul.f32 %v109, %v110
  %v112 = vsub.f32 1.0, %v111
  %v113 = vmul.f32 %v110, %v112
  %v114 = vadd.f32 %v110, %v113
  %vm115 = vweird.f32 %v109
  %vm116 = vweird.f32 %v110
  %vm117 = vmor %vm115, %vm116
  %v118 = vsel %vm117, %v110, %v114
  %v119 = vand.u32 2147483647, %v109
  %vm120 = vcmp.eq.f32.partialorder %v119, 8.507059e+37
  %v121 = vand.u32 %v109, 2147483648
  %v122 = vor.u32 1.1754944e-38, %v121
  %v123 = vsel %vm120, %v122, %v118
  %v124 = vmul.f32 1.0, %v123
  %v125 = vtanh.pop %v105
  %127 = vrot.lane.b32.xlu0 %v73, 32
  %v128 = vpop.permute.xlu0 %127
  %v130 = vmul.f32 %v124, %v128
  %132 = vrot.lane.b32.xlu0 %v125, 64
  %v133 = vpop.permute.xlu0 %132
  %v135 = vmul.f32 %v124, %v133
  %137 = vrot.lane.b32.xlu0 %v135, 32
  %v138 = vpop.permute.xlu0 %137
  %v140 = vadd.f32 %v130, %v138
  %v141 = vtanh.pop %v140
  %143 = vrot.lane.b32.xlu0 %v141, 64
  %v144 = vpop.permute.xlu0 %143
  %v146 = vmul.f32 %v124, %v144
  %148 = vrot.lane.b32.xlu0 %v146, 32
  %v149 = vpop.permute.xlu0 %148
  %151 = vst.msk [vmem:[#allocation4] sm:$0x3] %vm69, %v149
  %153 = vrot.lane.b32.xlu0 %v140, 96
  %v154 = vpop.permute.xlu0 %153
  %156 = vst.msk [vmem:[#allocation5] sm:$0x3] %vm69, %v154
  %157 = vst.msk [vmem:[#allocation3] sm:$0x3] %vm69, %v149
  %v158 = vld [vmem:[#allocation4] sm:$0x3]
  %v159 = vld [vmem:[#allocation5] sm:$0x3]
  %s160 = scalar_lea.vmem [#allocation2], 2
  %v161 = vld [vmem:[%s160] sm:$0x3]
  %v162 = vpack.c.bf16 %v158, %v158
  %v164 = vsel %vm88, %v162, 0
  %166 = vmatpush.bf16.msra.mxu0 0
  %167 = vmatpush.bf16.msra.mxu0 0
  %168 = vmatpush.bf16.msra.mxu0 0
  %169 = vmatpush.bf16.msra.mxu0 0
  %170 = vmatpush.bf16.msra.mxu0 0
  %171 = vmatpush.bf16.msra.mxu0 0
  %172 = vmatpush.bf16.msra.mxu0 %v85
  %173 = vmatpush.bf16.msra.mxu0 %v84
  %174 = vmatmul.bf16.gmra.mxu0 %v164
  %v175 = vpop.f32.mrf.mxu0
  %v176 = vadd.f32 0.0, %v175
  %v177 = vpop.f32.mrf.mxu0
  %178 = vdwg.mxu0
  %v179 = vadd.f32 %v161, %v176
  %v180 = vxor.u32 %v179, 2147483648
  %v181 = vmul.f32 %v180, 1.442695
  %v182 = vpow.pop %v181
  %v183 = vadd.f32 %v182, 1.0
  %v184 = vrcp.pop %v183
  %v185 = vmul.f32 %v183, %v184
  %v186 = vsub.f32 1.0, %v185
  %v187 = vmul.f32 %v184, %v186
  %v188 = vadd.f32 %v184, %v187
  %vm189 = vweird.f32 %v183
  %vm190 = vweird.f32 %v184
  %vm191 = vmor %vm189, %vm190
  %v192 = vsel %vm191, %v184, %v188
  %v193 = vand.u32 2147483647, %v183
  %vm194 = vcmp.eq.f32.partialorder %v193, 8.507059e+37
  %v195 = vand.u32 %v183, 2147483648
  %v196 = vor.u32 1.1754944e-38, %v195
  %v197 = vsel %vm194, %v196, %v192
  %v198 = vmul.f32 1.0, %v197
  %v199 = vtanh.pop %v179
  %201 = vrot.lane.b32.xlu0 %v159, 32
  %v202 = vpop.permute.xlu0 %201
  %v204 = vmul.f32 %v198, %v202
  %206 = vrot.lane.b32.xlu0 %v199, 64
  %v207 = vpop.permute.xlu0 %206
  %v209 = vmul.f32 %v198, %v207
  %211 = vrot.lane.b32.xlu0 %v209, 32
  %v212 = vpop.permute.xlu0 %211
  %v214 = vadd.f32 %v204, %v212
  %v215 = vtanh.pop %v214
  %217 = vrot.lane.b32.xlu0 %v215, 64
  %v218 = vpop.permute.xlu0 %217
  %v220 = vmul.f32 %v198, %v218
  %222 = vrot.lane.b32.xlu0 %v220, 32
  %v223 = vpop.permute.xlu0 %222
  %225 = vst.msk [vmem:[#allocation4] sm:$0x3] %vm69, %v223
  %227 = vrot.lane.b32.xlu0 %v214, 96
  %v228 = vpop.permute.xlu0 %227
  %230 = vst.msk [vmem:[#allocation5] sm:$0x3] %vm69, %v228
  %s231 = scalar_lea.vmem [#allocation3], 2
  %232 = vst.msk [vmem:[%s231] sm:$0x3] %vm69, %v223
  %v233 = vld [vmem:[#allocation4] sm:$0x3]
  %v234 = vld [vmem:[#allocation5] sm:$0x3]
  %s235 = scalar_lea.vmem [#allocation2], 4
  %v236 = vld [vmem:[%s235] sm:$0x3]
  %v237 = vpack.c.bf16 %v233, %v233
  %v239 = vsel %vm88, %v237, 0
  %241 = vmatpush.bf16.msra.mxu0 0
  %242 = vmatpush.bf16.msra.mxu0 0
  %243 = vmatpush.bf16.msra.mxu0 0
  %244 = vmatpush.bf16.msra.mxu0 0
  %245 = vmatpush.bf16.msra.mxu0 0
  %246 = vmatpush.bf16.msra.mxu0 0
  %247 = vmatpush.bf16.msra.mxu0 %v85
  %248 = vmatpush.bf16.msra.mxu0 %v84
  %249 = vmatmul.bf16.gmra.mxu0 %v239
  %v250 = vpop.f32.mrf.mxu0
  %v251 = vadd.f32 0.0, %v250
  %v252 = vpop.f32.mrf.mxu0
  %253 = vdwg.mxu0
  %v254 = vadd.f32 %v236, %v251
  %v255 = vxor.u32 %v254, 2147483648
  %v256 = vmul.f32 %v255, 1.442695
  %v257 = vpow.pop %v256
  %v258 = vadd.f32 %v257, 1.0
  %v259 = vrcp.pop %v258
  %v260 = vmul.f32 %v258, %v259
  %v261 = vsub.f32 1.0, %v260
  %v262 = vmul.f32 %v259, %v261
  %v263 = vadd.f32 %v259, %v262
  %vm264 = vweird.f32 %v258
  %vm265 = vweird.f32 %v259
  %vm266 = vmor %vm264, %vm265
  %v267 = vsel %vm266, %v259, %v263
  %v268 = vand.u32 2147483647, %v258
  %vm269 = vcmp.eq.f32.partialorder %v268, 8.507059e+37
  %v270 = vand.u32 %v258, 2147483648
  %v271 = vor.u32 1.1754944e-38, %v270
  %v272 = vsel %vm269, %v271, %v267
  %v273 = vmul.f32 1.0, %v272
  %v274 = vtanh.pop %v254
  %276 = vrot.lane.b32.xlu0 %v234, 32
  %v277 = vpop.permute.xlu0 %276
  %v279 = vmul.f32 %v273, %v277
  %281 = vrot.lane.b32.xlu0 %v274, 64
  %v282 = vpop.permute.xlu0 %281
  %v284 = vmul.f32 %v273, %v282
  %286 = vrot.lane.b32.xlu0 %v284, 32
  %v287 = vpop.permute.xlu0 %286
  %v289 = vadd.f32 %v279, %v287
  %v290 = vtanh.pop %v289
  %292 = vrot.lane.b32.xlu0 %v290, 64
  %v293 = vpop.permute.xlu0 %292
  %v295 = vmul.f32 %v273, %v293
  %297 = vrot.lane.b32.xlu0 %v295, 32
  %v298 = vpop.permute.xlu0 %297
  %300 = vst.msk [vmem:[#allocation4] sm:$0x3] %vm69, %v298
  %302 = vrot.lane.b32.xlu0 %v289, 96
  %v303 = vpop.permute.xlu0 %302
  %305 = vst.msk [vmem:[#allocation5] sm:$0x3] %vm69, %v303
  %s306 = scalar_lea.vmem [#allocation3], 4
  %307 = vst.msk [vmem:[%s306] sm:$0x3] %vm69, %v298
  %v308 = vld [vmem:[#allocation4] sm:$0x3]
  %v309 = vld [vmem:[#allocation5] sm:$0x3]
  %s310 = scalar_lea.vmem [#allocation2], 6
  %v311 = vld [vmem:[%s310] sm:$0x3]
  %v312 = vpack.c.bf16 %v308, %v308
  %v314 = vsel %vm88, %v312, 0
  %316 = vmatpush.bf16.msra.mxu0 0
  %317 = vmatpush.bf16.msra.mxu0 0
  %318 = vmatpush.bf16.msra.mxu0 0
  %319 = vmatpush.bf16.msra.mxu0 0
  %320 = vmatpush.bf16.msra.mxu0 0
  %321 = vmatpush.bf16.msra.mxu0 0
  %322 = vmatpush.bf16.msra.mxu0 %v85
  %323 = vmatpush.bf16.msra.mxu0 %v84
  %324 = vmatmul.bf16.gmra.mxu0 %v314
  %v325 = vpop.f32.mrf.mxu0
  %v326 = vadd.f32 0.0, %v325
  %v327 = vpop.f32.mrf.mxu0
  %328 = vdwg.mxu0
  %v329 = vadd.f32 %v311, %v326
  %v330 = vxor.u32 %v329, 2147483648
  %v331 = vmul.f32 %v330, 1.442695
  %v332 = vpow.pop %v331
  %v333 = vadd.f32 %v332, 1.0
  %v334 = vrcp.pop %v333
  %v335 = vmul.f32 %v333, %v334
  %v336 = vsub.f32 1.0, %v335
  %v337 = vmul.f32 %v334, %v336
  %v338 = vadd.f32 %v334, %v337
  %vm339 = vweird.f32 %v333
  %vm340 = vweird.f32 %v334
  %vm341 = vmor %vm339, %vm340
  %v342 = vsel %vm341, %v334, %v338
  %v343 = vand.u32 2147483647, %v333
  %vm344 = vcmp.eq.f32.partialorder %v343, 8.507059e+37
  %v345 = vand.u32 %v333, 2147483648
  %v346 = vor.u32 1.1754944e-38, %v345
  %v347 = vsel %vm344, %v346, %v342
  %v348 = vmul.f32 1.0, %v347
  %v349 = vtanh.pop %v329
  %351 = vrot.lane.b32.xlu0 %v309, 32
  %v352 = vpop.permute.xlu0 %351
  %v354 = vmul.f32 %v348, %v352
  %356 = vrot.lane.b32.xlu0 %v349, 64
  %v357 = vpop.permute.xlu0 %356
  %v359 = vmul.f32 %v348, %v357
  %361 = vrot.lane.b32.xlu0 %v359, 32
  %v362 = vpop.permute.xlu0 %361
  %v364 = vadd.f32 %v354, %v362
  %v365 = vtanh.pop %v364
  %367 = vrot.lane.b32.xlu0 %v365, 64
  %v368 = vpop.permute.xlu0 %367
  %v370 = vmul.f32 %v348, %v368
  %372 = vrot.lane.b32.xlu0 %v370, 32
  %v373 = vpop.permute.xlu0 %372
  %375 = vst.msk [vmem:[#allocation4] sm:$0x3] %vm69, %v373
  %377 = vrot.lane.b32.xlu0 %v364, 96
  %v378 = vpop.permute.xlu0 %377
  %380 = vst.msk [vmem:[#allocation5] sm:$0x3] %vm69, %v378
  %s381 = scalar_lea.vmem [#allocation3], 6
  %382 = vst.msk [vmem:[%s381] sm:$0x3] %vm69, %v373
  %v383 = vld [vmem:[#allocation4] sm:$0x3]
  %v384 = vld [vmem:[#allocation5] sm:$0x3]
  %s385 = scalar_lea.vmem [#allocation2], 8
  %v386 = vld [vmem:[%s385] sm:$0x3]
  %v387 = vpack.c.bf16 %v383, %v383
  %v389 = vsel %vm88, %v387, 0
  %391 = vmatpush.bf16.msra.mxu0 0
  %392 = vmatpush.bf16.msra.mxu0 0
  %393 = vmatpush.bf16.msra.mxu0 0
  %394 = vmatpush.bf16.msra.mxu0 0
  %395 = vmatpush.bf16.msra.mxu0 0
  %396 = vmatpush.bf16.msra.mxu0 0
  %397 = vmatpush.bf16.msra.mxu0 %v85
  %398 = vmatpush.bf16.msra.mxu0 %v84
  %399 = vmatmul.bf16.gmra.mxu0 %v389
  %v400 = vpop.f32.mrf.mxu0
  %v401 = vadd.f32 0.0, %v400
  %v402 = vpop.f32.mrf.mxu0
  %403 = vdwg.mxu0
  %v404 = vadd.f32 %v386, %v401
  %v405 = vxor.u32 %v404, 2147483648
  %v406 = vmul.f32 %v405, 1.442695
  %v407 = vpow.pop %v406
  %v408 = vadd.f32 %v407, 1.0
  %v409 = vrcp.pop %v408
  %v410 = vmul.f32 %v408, %v409
  %v411 = vsub.f32 1.0, %v410
  %v412 = vmul.f32 %v409, %v411
  %v413 = vadd.f32 %v409, %v412
  %vm414 = vweird.f32 %v408
  %vm415 = vweird.f32 %v409
  %vm416 = vmor %vm414, %vm415
  %v417 = vsel %vm416, %v409, %v413
  %v418 = vand.u32 2147483647, %v408
  %vm419 = vcmp.eq.f32.partialorder %v418, 8.507059e+37
  %v420 = vand.u32 %v408, 2147483648
  %v421 = vor.u32 1.1754944e-38, %v420
  %v422 = vsel %vm419, %v421, %v417
  %v423 = vmul.f32 1.0, %v422
  %v424 = vtanh.pop %v404
  %426 = vrot.lane.b32.xlu0 %v384, 32
  %v427 = vpop.permute.xlu0 %426
  %v429 = vmul.f32 %v423, %v427
  %431 = vrot.lane.b32.xlu0 %v424, 64
  %v432 = vpop.permute.xlu0 %431
  %v434 = vmul.f32 %v423, %v432
  %436 = vrot.lane.b32.xlu0 %v434, 32
  %v437 = vpop.permute.xlu0 %436
  %v439 = vadd.f32 %v429, %v437
  %v440 = vtanh.pop %v439
  %442 = vrot.lane.b32.xlu0 %v440, 64
  %v443 = vpop.permute.xlu0 %442
  %v445 = vmul.f32 %v423, %v443
  %447 = vrot.lane.b32.xlu0 %v445, 32
  %v448 = vpop.permute.xlu0 %447
  %450 = vst.msk [vmem:[#allocation4] sm:$0x3] %vm69, %v448
  %452 = vrot.lane.b32.xlu0 %v439, 96
  %v453 = vpop.permute.xlu0 %452
  %455 = vst.msk [vmem:[#allocation5] sm:$0x3] %vm69, %v453
  %s456 = scalar_lea.vmem [#allocation3], 8
  %457 = vst.msk [vmem:[%s456] sm:$0x3] %vm69, %v448
  %v458 = vld [vmem:[#allocation4] sm:$0x3]
  %v459 = vld [vmem:[#allocation5] sm:$0x3]
  %s460 = scalar_lea.vmem [#allocation2], 10
  %v461 = vld [vmem:[%s460] sm:$0x3]
  %v462 = vpack.c.bf16 %v458, %v458
  %v464 = vsel %vm88, %v462, 0
  %466 = vmatpush.bf16.msra.mxu0 0
  %467 = vmatpush.bf16.msra.mxu0 0
  %468 = vmatpush.bf16.msra.mxu0 0
  %469 = vmatpush.bf16.msra.mxu0 0
  %470 = vmatpush.bf16.msra.mxu0 0
  %471 = vmatpush.bf16.msra.mxu0 0
  %472 = vmatpush.bf16.msra.mxu0 %v85
  %473 = vmatpush.bf16.msra.mxu0 %v84
  %474 = vmatmul.bf16.gmra.mxu0 %v464
  %v475 = vpop.f32.mrf.mxu0
  %v476 = vadd.f32 0.0, %v475
  %v477 = vpop.f32.mrf.mxu0
  %478 = vdwg.mxu0
  %v479 = vadd.f32 %v461, %v476
  %v480 = vxor.u32 %v479, 2147483648
  %v481 = vmul.f32 %v480, 1.442695
  %v482 = vpow.pop %v481
  %v483 = vadd.f32 %v482, 1.0
  %v484 = vrcp.pop %v483
  %v485 = vmul.f32 %v483, %v484
  %v486 = vsub.f32 1.0, %v485
  %v487 = vmul.f32 %v484, %v486
  %v488 = vadd.f32 %v484, %v487
  %vm489 = vweird.f32 %v483
  %vm490 = vweird.f32 %v484
  %vm491 = vmor %vm489, %vm490
  %v492 = vsel %vm491, %v484, %v488
  %v493 = vand.u32 2147483647, %v483
  %vm494 = vcmp.eq.f32.partialorder %v493, 8.507059e+37
  %v495 = vand.u32 %v483, 2147483648
  %v496 = vor.u32 1.1754944e-38, %v495
  %v497 = vsel %vm494, %v496, %v492
  %v498 = vmul.f32 1.0, %v497
  %v499 = vtanh.pop %v479
  %501 = vrot.lane.b32.xlu0 %v459, 32
  %v502 = vpop.permute.xlu0 %501
  %v504 = vmul.f32 %v498, %v502
  %506 = vrot.lane.b32.xlu0 %v499, 64
  %v507 = vpop.permute.xlu0 %506
  %v509 = vmul.f32 %v498, %v507
  %511 = vrot.lane.b32.xlu0 %v509, 32
  %v512 = vpop.permute.xlu0 %511
  %v514 = vadd.f32 %v504, %v512
  %v515 = vtanh.pop %v514
  %517 = vrot.lane.b32.xlu0 %v515, 64
  %v518 = vpop.permute.xlu0 %517
  %v520 = vmul.f32 %v498, %v518
  %522 = vrot.lane.b32.xlu0 %v520, 32
  %v523 = vpop.permute.xlu0 %522
  %525 = vst.msk [vmem:[#allocation4] sm:$0x3] %vm69, %v523
  %527 = vrot.lane.b32.xlu0 %v514, 96
  %v528 = vpop.permute.xlu0 %527
  %530 = vst.msk [vmem:[#allocation5] sm:$0x3] %vm69, %v528
  %s531 = scalar_lea.vmem [#allocation3], 10
  %532 = vst.msk [vmem:[%s531] sm:$0x3] %vm69, %v523
  %v533 = vld [vmem:[#allocation4] sm:$0x3]
  %v534 = vld [vmem:[#allocation5] sm:$0x3]
  %s535 = scalar_lea.vmem [#allocation2], 12
  %v536 = vld [vmem:[%s535] sm:$0x3]
  %v537 = vpack.c.bf16 %v533, %v533
  %v539 = vsel %vm88, %v537, 0
  %541 = vmatpush.bf16.msra.mxu0 0
  %542 = vmatpush.bf16.msra.mxu0 0
  %543 = vmatpush.bf16.msra.mxu0 0
  %544 = vmatpush.bf16.msra.mxu0 0
  %545 = vmatpush.bf16.msra.mxu0 0
  %546 = vmatpush.bf16.msra.mxu0 0
  %547 = vmatpush.bf16.msra.mxu0 %v85
  %548 = vmatpush.bf16.msra.mxu0 %v84
  %549 = vmatmul.bf16.gmra.mxu0 %v539
  %v550 = vpop.f32.mrf.mxu0
  %v551 = vadd.f32 0.0, %v550
  %v552 = vpop.f32.mrf.mxu0
  %553 = vdwg.mxu0
  %v554 = vadd.f32 %v536, %v551
  %v555 = vxor.u32 %v554, 2147483648
  %v556 = vmul.f32 %v555, 1.442695
  %v557 = vpow.pop %v556
  %v558 = vadd.f32 %v557, 1.0
  %v559 = vrcp.pop %v558
  %v560 = vmul.f32 %v558, %v559
  %v561 = vsub.f32 1.0, %v560
  %v562 = vmul.f32 %v559, %v561
  %v563 = vadd.f32 %v559, %v562
  %vm564 = vweird.f32 %v558
  %vm565 = vweird.f32 %v559
  %vm566 = vmor %vm564, %vm565
  %v567 = vsel %vm566, %v559, %v563
  %v568 = vand.u32 2147483647, %v558
  %vm569 = vcmp.eq.f32.partialorder %v568, 8.507059e+37
  %v570 = vand.u32 %v558, 2147483648
  %v571 = vor.u32 1.1754944e-38, %v570
  %v572 = vsel %vm569, %v571, %v567
  %v573 = vmul.f32 1.0, %v572
  %v574 = vtanh.pop %v554
  %576 = vrot.lane.b32.xlu0 %v534, 32
  %v577 = vpop.permute.xlu0 %576
  %v579 = vmul.f32 %v573, %v577
  %581 = vrot.lane.b32.xlu0 %v574, 64
  %v582 = vpop.permute.xlu0 %581
  %v584 = vmul.f32 %v573, %v582
  %586 = vrot.lane.b32.xlu0 %v584, 32
  %v587 = vpop.permute.xlu0 %586
  %v589 = vadd.f32 %v579, %v587
  %v590 = vtanh.pop %v589
  %592 = vrot.lane.b32.xlu0 %v590, 64
  %v593 = vpop.permute.xlu0 %592
  %v595 = vmul.f32 %v573, %v593
  %597 = vrot.lane.b32.xlu0 %v595, 32
  %v598 = vpop.permute.xlu0 %597
  %600 = vst.msk [vmem:[#allocation4] sm:$0x3] %vm69, %v598
  %602 = vrot.lane.b32.xlu0 %v589, 96
  %v603 = vpop.permute.xlu0 %602
  %605 = vst.msk [vmem:[#allocation5] sm:$0x3] %vm69, %v603
  %s606 = scalar_lea.vmem [#allocation3], 12
  %607 = vst.msk [vmem:[%s606] sm:$0x3] %vm69, %v598
  %v608 = vld [vmem:[#allocation4] sm:$0x3]
  %v609 = vld [vmem:[#allocation5] sm:$0x3]
  %s610 = scalar_lea.vmem [#allocation2], 14
  %v611 = vld [vmem:[%s610] sm:$0x3]
  %v612 = vpack.c.bf16 %v608, %v608
  %v614 = vsel %vm88, %v612, 0
  %616 = vmatpush.bf16.msra.mxu0 0
  %617 = vmatpush.bf16.msra.mxu0 0
  %618 = vmatpush.bf16.msra.mxu0 0
  %619 = vmatpush.bf16.msra.mxu0 0
  %620 = vmatpush.bf16.msra.mxu0 0
  %621 = vmatpush.bf16.msra.mxu0 0
  %622 = vmatpush.bf16.msra.mxu0 %v85
  %623 = vmatpush.bf16.msra.mxu0 %v84
  %624 = vmatmul.bf16.gmra.mxu0 %v614
  %v625 = vpop.f32.mrf.mxu0
  %v626 = vadd.f32 0.0, %v625
  %v627 = vpop.f32.mrf.mxu0
  %628 = vdwg.mxu0
  %v629 = vadd.f32 %v611, %v626
  %v630 = vxor.u32 %v629, 2147483648
  %v631 = vmul.f32 %v630, 1.442695
  %v632 = vpow.pop %v631
  %v633 = vadd.f32 %v632, 1.0
  %v634 = vrcp.pop %v633
  %v635 = vmul.f32 %v633, %v634
  %v636 = vsub.f32 1.0, %v635
  %v637 = vmul.f32 %v634, %v636
  %v638 = vadd.f32 %v634, %v637
  %vm639 = vweird.f32 %v633
  %vm640 = vweird.f32 %v634
  %vm641 = vmor %vm639, %vm640
  %v642 = vsel %vm641, %v634, %v638
  %v643 = vand.u32 2147483647, %v633
  %vm644 = vcmp.eq.f32.partialorder %v643, 8.507059e+37
  %v645 = vand.u32 %v633, 2147483648
  %v646 = vor.u32 1.1754944e-38, %v645
  %v647 = vsel %vm644, %v646, %v642
  %v648 = vmul.f32 1.0, %v647
  %v649 = vtanh.pop %v629
  %651 = vrot.lane.b32.xlu0 %v609, 32
  %v652 = vpop.permute.xlu0 %651
  %v654 = vmul.f32 %v648, %v652
  %656 = vrot.lane.b32.xlu0 %v649, 64
  %v657 = vpop.permute.xlu0 %656
  %v659 = vmul.f32 %v648, %v657
  %661 = vrot.lane.b32.xlu0 %v659, 32
  %v662 = vpop.permute.xlu0 %661
  %v664 = vadd.f32 %v654, %v662
  %v665 = vtanh.pop %v664
  %667 = vrot.lane.b32.xlu0 %v665, 64
  %v668 = vpop.permute.xlu0 %667
  %v670 = vmul.f32 %v648, %v668
  %672 = vrot.lane.b32.xlu0 %v670, 32
  %v673 = vpop.permute.xlu0 %672
  %675 = vst.msk [vmem:[#allocation4] sm:$0x3] %vm69, %v673
  %677 = vrot.lane.b32.xlu0 %v664, 96
  %v678 = vpop.permute.xlu0 %677
  %680 = vst.msk [vmem:[#allocation5] sm:$0x3] %vm69, %v678
  %s681 = scalar_lea.vmem [#allocation3], 14
  %682 = vst.msk [vmem:[%s681] sm:$0x3] %vm69, %v673
  %v683 = vld [vmem:[%s4] sm:$0xf]
  %v684 = vld [vmem:[%s4 + $0x4] sm:$0xf]
  %v685 = vld [vmem:[%s4 + $0x8] sm:$0xf]
  %v686 = vld [vmem:[%s4 + $0xc] sm:$0xf]
  %v687 = vld [vmem:[%s5] sm:$0xf]
  %v688 = vld [vmem:[%s5 + $0x4] sm:$0xf]
  %v689 = vld [vmem:[%s5 + $0x8] sm:$0xf]
  %v690 = vld [vmem:[%s5 + $0xc] sm:$0xf]
  %v691 = vld [vmem:[%s6] sm:$0x1]
  %v692 = vld [vmem:[#allocation3] sm:$0xff]
  %v693 = vld [vmem:[#allocation3 + $0x8] sm:$0xff]
  %v694 = vpack.c.bf16 %v693, %v692
  %v696 = vperm.slane %v691, 0
  %v702 = vunpack.c.l.b16 %v683
  %v703 = vunpack.c.l.b16 %v684
  %v704 = vunpack.c.l.b16 %v685
  %v705 = vunpack.c.l.b16 %v686
  %v706 = vpack.c.b16 %v703, %v702
  %v707 = vpack.c.b16 %v705, %v704
  %v711 = vsel %vm88, %v694, 0
  %713 = vmatpush.bf16.msra.mxu0 0
  %714 = vmatpush.bf16.msra.mxu0 0
  %715 = vmatpush.bf16.msra.mxu0 0
  %716 = vmatpush.bf16.msra.mxu0 0
  %717 = vmatpush.bf16.msra.mxu0 0
  %718 = vmatpush.bf16.msra.mxu0 0
  %719 = vmatpush.bf16.msra.mxu0 %v707
  %720 = vmatpush.bf16.msra.mxu0 %v706
  %721 = vmatmul.bf16.gmra.mxu0 %v711
  %v722 = vpop.f32.mrf.mxu0
  %v723 = vadd.f32 %v696, %v722
  %v724 = vpop.f32.mrf.mxu0
  %v725 = vadd.f32 %v696, %v724
  %726 = vdwg.mxu0
  %727 = vst [vmem:[#allocation2] sm:$0xff] %v723
  %728 = vst [vmem:[#allocation2 + $0x8] sm:$0xff] %v725
  %729 = vst.msk [vmem:[#allocation4] sm:$0x3] %vm69, 0.0
  %730 = vst.msk [vmem:[#allocation5] sm:$0x3] %vm69, 0.0
  %v731 = vld [vmem:[#allocation4] sm:$0x3]
  %v732 = vld [vmem:[#allocation5] sm:$0x3]
  %v733 = vld [vmem:[#allocation2] sm:$0x3]
  %v734 = vpack.c.bf16 %v731, %v731
  %v739 = vunpack.c.l.b16 %v687
  %v740 = vunpack.c.l.b16 %v688
  %v741 = vunpack.c.l.b16 %v689
  %v742 = vunpack.c.l.b16 %v690
  %v743 = vpack.c.b16 %v740, %v739
  %v744 = vpack.c.b16 %v742, %v741
  %v748 = vsel %vm88, %v734, 0
  %750 = vmatpush.bf16.msra.mxu0 0
  %751 = vmatpush.bf16.msra.mxu0 0
  %752 = vmatpush.bf16.msra.mxu0 0
  %753 = vmatpush.bf16.msra.mxu0 0
  %754 = vmatpush.bf16.msra.mxu0 0
  %755 = vmatpush.bf16.msra.mxu0 0
  %756 = vmatpush.bf16.msra.mxu0 %v744
  %757 = vmatpush.bf16.msra.mxu0 %v743
  %758 = vmatmul.bf16.gmra.mxu0 %v748
  %v759 = vpop.f32.mrf.mxu0
  %v760 = vadd.f32 0.0, %v759
  %v761 = vpop.f32.mrf.mxu0
  %762 = vdwg.mxu0
  %v763 = vadd.f32 %v733, %v760
  %v764 = vxor.u32 %v763, 2147483648
  %v765 = vmul.f32 %v764, 1.442695
  %v766 = vpow.pop %v765
  %v767 = vadd.f32 %v766, 1.0
  %v768 = vrcp.pop %v767
  %v769 = vmul.f32 %v767, %v768
  %v770 = vsub.f32 1.0, %v769
  %v771 = vmul.f32 %v768, %v770
  %v772 = vadd.f32 %v768, %v771
  %vm773 = vweird.f32 %v767
  %vm774 = vweird.f32 %v768
  %vm775 = vmor %vm773, %vm774
  %v776 = vsel %vm775, %v768, %v772
  %v777 = vand.u32 2147483647, %v767
  %vm778 = vcmp.eq.f32.partialorder %v777, 8.507059e+37
  %v779 = vand.u32 %v767, 2147483648
  %v780 = vor.u32 1.1754944e-38, %v779
  %v781 = vsel %vm778, %v780, %v776
  %v782 = vmul.f32 1.0, %v781
  %v783 = vtanh.pop %v763
  %785 = vrot.lane.b32.xlu0 %v732, 32
  %v786 = vpop.permute.xlu0 %785
  %v788 = vmul.f32 %v782, %v786
  %790 = vrot.lane.b32.xlu0 %v783, 64
  %v791 = vpop.permute.xlu0 %790
  %v793 = vmul.f32 %v782, %v791
  %795 = vrot.lane.b32.xlu0 %v793, 32
  %v796 = vpop.permute.xlu0 %795
  %v798 = vadd.f32 %v788, %v796
  %v799 = vtanh.pop %v798
  %801 = vrot.lane.b32.xlu0 %v799, 64
  %v802 = vpop.permute.xlu0 %801
  %v804 = vmul.f32 %v782, %v802
  %806 = vrot.lane.b32.xlu0 %v804, 32
  %v807 = vpop.permute.xlu0 %806
  %809 = vst.msk [vmem:[#allocation4] sm:$0x3] %vm69, %v807
  %811 = vrot.lane.b32.xlu0 %v798, 96
  %v812 = vpop.permute.xlu0 %811
  %814 = vst.msk [vmem:[#allocation5] sm:$0x3] %vm69, %v812
  %vm815 = vcmask 254977
  %816 = vst.msk [vmem:[#allocation6 - $0x1] sm:$0x2] %vm815, %v807
  %v817 = vld [vmem:[#allocation4] sm:$0x3]
  %v818 = vld [vmem:[#allocation5] sm:$0x3]
  %v819 = vld [vmem:[%s160] sm:$0x3]
  %v820 = vpack.c.bf16 %v817, %v817
  %v822 = vsel %vm88, %v820, 0
  %824 = vmatpush.bf16.msra.mxu0 0
  %825 = vmatpush.bf16.msra.mxu0 0
  %826 = vmatpush.bf16.msra.mxu0 0
  %827 = vmatpush.bf16.msra.mxu0 0
  %828 = vmatpush.bf16.msra.mxu0 0
  %829 = vmatpush.bf16.msra.mxu0 0
  %830 = vmatpush.bf16.msra.mxu0 %v744
  %831 = vmatpush.bf16.msra.mxu0 %v743
  %832 = vmatmul.bf16.gmra.mxu0 %v822
  %v833 = vpop.f32.mrf.mxu0
  %v834 = vadd.f32 0.0, %v833
  %v835 = vpop.f32.mrf.mxu0
  %836 = vdwg.mxu0
  %v837 = vadd.f32 %v819, %v834
  %v838 = vxor.u32 %v837, 2147483648
  %v839 = vmul.f32 %v838, 1.442695
  %v840 = vpow.pop %v839
  %v841 = vadd.f32 %v840, 1.0
  %v842 = vrcp.pop %v841
  %v843 = vmul.f32 %v841, %v842
  %v844 = vsub.f32 1.0, %v843
  %v845 = vmul.f32 %v842, %v844
  %v846 = vadd.f32 %v842, %v845
  %vm847 = vweird.f32 %v841
  %vm848 = vweird.f32 %v842
  %vm849 = vmor %vm847, %vm848
  %v850 = vsel %vm849, %v842, %v846
  %v851 = vand.u32 2147483647, %v841
  %vm852 = vcmp.eq.f32.partialorder %v851, 8.507059e+37
  %v853 = vand.u32 %v841, 2147483648
  %v854 = vor.u32 1.1754944e-38, %v853
  %v855 = vsel %vm852, %v854, %v850
  %v856 = vmul.f32 1.0, %v855
  %v857 = vtanh.pop %v837
  %859 = vrot.lane.b32.xlu0 %v818, 32
  %v860 = vpop.permute.xlu0 %859
  %v862 = vmul.f32 %v856, %v860
  %864 = vrot.lane.b32.xlu0 %v857, 64
  %v865 = vpop.permute.xlu0 %864
  %v867 = vmul.f32 %v856, %v865
  %869 = vrot.lane.b32.xlu0 %v867, 32
  %v870 = vpop.permute.xlu0 %869
  %v872 = vadd.f32 %v862, %v870
  %v873 = vtanh.pop %v872
  %875 = vrot.lane.b32.xlu0 %v873, 64
  %v876 = vpop.permute.xlu0 %875
  %v878 = vmul.f32 %v856, %v876
  %880 = vrot.lane.b32.xlu0 %v878, 32
  %v881 = vpop.permute.xlu0 %880
  %883 = vst.msk [vmem:[#allocation4] sm:$0x3] %vm69, %v881
  %885 = vrot.lane.b32.xlu0 %v872, 96
  %v886 = vpop.permute.xlu0 %885
  %888 = vst.msk [vmem:[#allocation5] sm:$0x3] %vm69, %v886
  %889 = vst.msk [vmem:[#allocation6] sm:$0x2] %vm815, %v881
  %v890 = vld [vmem:[#allocation4] sm:$0x3]
  %v891 = vld [vmem:[#allocation5] sm:$0x3]
  %v892 = vld [vmem:[%s235] sm:$0x3]
  %v893 = vpack.c.bf16 %v890, %v890
  %v895 = vsel %vm88, %v893, 0
  %897 = vmatpush.bf16.msra.mxu0 0
  %898 = vmatpush.bf16.msra.mxu0 0
  %899 = vmatpush.bf16.msra.mxu0 0
  %900 = vmatpush.bf16.msra.mxu0 0
  %901 = vmatpush.bf16.msra.mxu0 0
  %902 = vmatpush.bf16.msra.mxu0 0
  %903 = vmatpush.bf16.msra.mxu0 %v744
  %904 = vmatpush.bf16.msra.mxu0 %v743
  %905 = vmatmul.bf16.gmra.mxu0 %v895
  %v906 = vpop.f32.mrf.mxu0
  %v907 = vadd.f32 0.0, %v906
  %v908 = vpop.f32.mrf.mxu0
  %909 = vdwg.mxu0
  %v910 = vadd.f32 %v892, %v907
  %v911 = vxor.u32 %v910, 2147483648
  %v912 = vmul.f32 %v911, 1.442695
  %v913 = vpow.pop %v912
  %v914 = vadd.f32 %v913, 1.0
  %v915 = vrcp.pop %v914
  %v916 = vmul.f32 %v914, %v915
  %v917 = vsub.f32 1.0, %v916
  %v918 = vmul.f32 %v915, %v917
  %v919 = vadd.f32 %v915, %v918
  %vm920 = vweird.f32 %v914
  %vm921 = vweird.f32 %v915
  %vm922 = vmor %vm920, %vm921
  %v923 = vsel %vm922, %v915, %v919
  %v924 = vand.u32 2147483647, %v914
  %vm925 = vcmp.eq.f32.partialorder %v924, 8.507059e+37
  %v926 = vand.u32 %v914, 2147483648
  %v927 = vor.u32 1.1754944e-38, %v926
  %v928 = vsel %vm925, %v927, %v923
  %v929 = vmul.f32 1.0, %v928
  %v930 = vtanh.pop %v910
  %932 = vrot.lane.b32.xlu0 %v891, 32
  %v933 = vpop.permute.xlu0 %932
  %v935 = vmul.f32 %v929, %v933
  %937 = vrot.lane.b32.xlu0 %v930, 64
  %v938 = vpop.permute.xlu0 %937
  %v940 = vmul.f32 %v929, %v938
  %942 = vrot.lane.b32.xlu0 %v940, 32
  %v943 = vpop.permute.xlu0 %942
  %v945 = vadd.f32 %v935, %v943
  %v946 = vtanh.pop %v945
  %948 = vrot.lane.b32.xlu0 %v946, 64
  %v949 = vpop.permute.xlu0 %948
  %v951 = vmul.f32 %v929, %v949
  %953 = vrot.lane.b32.xlu0 %v951, 32
  %v954 = vpop.permute.xlu0 %953
  %956 = vst.msk [vmem:[#allocation4] sm:$0x3] %vm69, %v954
  %958 = vrot.lane.b32.xlu0 %v945, 96
  %v959 = vpop.permute.xlu0 %958
  %961 = vst.msk [vmem:[#allocation5] sm:$0x3] %vm69, %v959
  %962 = vst.msk [vmem:[#allocation6 + $0x1] sm:$0x2] %vm815, %v954
  %v963 = vld [vmem:[#allocation4] sm:$0x3]
  %v964 = vld [vmem:[#allocation5] sm:$0x3]
  %v965 = vld [vmem:[%s310] sm:$0x3]
  %v966 = vpack.c.bf16 %v963, %v963
  %v968 = vsel %vm88, %v966, 0
  %970 = vmatpush.bf16.msra.mxu0 0
  %971 = vmatpush.bf16.msra.mxu0 0
  %972 = vmatpush.bf16.msra.mxu0 0
  %973 = vmatpush.bf16.msra.mxu0 0
  %974 = vmatpush.bf16.msra.mxu0 0
  %975 = vmatpush.bf16.msra.mxu0 0
  %976 = vmatpush.bf16.msra.mxu0 %v744
  %977 = vmatpush.bf16.msra.mxu0 %v743
  %978 = vmatmul.bf16.gmra.mxu0 %v968
  %v979 = vpop.f32.mrf.mxu0
  %v980 = vadd.f32 0.0, %v979
  %v981 = vpop.f32.mrf.mxu0
  %982 = vdwg.mxu0
  %v983 = vadd.f32 %v965, %v980
  %v984 = vxor.u32 %v983, 2147483648
  %v985 = vmul.f32 %v984, 1.442695
  %v986 = vpow.pop %v985
  %v987 = vadd.f32 %v986, 1.0
  %v988 = vrcp.pop %v987
  %v989 = vmul.f32 %v987, %v988
  %v990 = vsub.f32 1.0, %v989
  %v991 = vmul.f32 %v988, %v990
  %v992 = vadd.f32 %v988, %v991
  %vm993 = vweird.f32 %v987
  %vm994 = vweird.f32 %v988
  %vm995 = vmor %vm993, %vm994
  %v996 = vsel %vm995, %v988, %v992
  %v997 = vand.u32 2147483647, %v987
  %vm998 = vcmp.eq.f32.partialorder %v997, 8.507059e+37
  %v999 = vand.u32 %v987, 2147483648
  %v1000 = vor.u32 1.1754944e-38, %v999
  %v1001 = vsel %vm998, %v1000, %v996
  %v1002 = vmul.f32 1.0, %v1001
  %v1003 = vtanh.pop %v983
  %1005 = vrot.lane.b32.xlu0 %v964, 32
  %v1006 = vpop.permute.xlu0 %1005
  %v1008 = vmul.f32 %v1002, %v1006
  %1010 = vrot.lane.b32.xlu0 %v1003, 64
  %v1011 = vpop.permute.xlu0 %1010
  %v1013 = vmul.f32 %v1002, %v1011
  %1015 = vrot.lane.b32.xlu0 %v1013, 32
  %v1016 = vpop.permute.xlu0 %1015
  %v1018 = vadd.f32 %v1008, %v1016
  %v1019 = vtanh.pop %v1018
  %1021 = vrot.lane.b32.xlu0 %v1019, 64
  %v1022 = vpop.permute.xlu0 %1021
  %v1024 = vmul.f32 %v1002, %v1022
  %1026 = vrot.lane.b32.xlu0 %v1024, 32
  %v1027 = vpop.permute.xlu0 %1026
  %1029 = vst.msk [vmem:[#allocation4] sm:$0x3] %vm69, %v1027
  %1031 = vrot.lane.b32.xlu0 %v1018, 96
  %v1032 = vpop.permute.xlu0 %1031
  %1034 = vst.msk [vmem:[#allocation5] sm:$0x3] %vm69, %v1032
  %1035 = vst.msk [vmem:[#allocation6 + $0x2] sm:$0x2] %vm815, %v1027
  %v1036 = vld [vmem:[#allocation4] sm:$0x3]
  %v1037 = vld [vmem:[#allocation5] sm:$0x3]
  %v1038 = vld [vmem:[%s385] sm:$0x3]
  %v1039 = vpack.c.bf16 %v1036, %v1036
  %v1041 = vsel %vm88, %v1039, 0
  %1043 = vmatpush.bf16.msra.mxu0 0
  %1044 = vmatpush.bf16.msra.mxu0 0
  %1045 = vmatpush.bf16.msra.mxu0 0
  %1046 = vmatpush.bf16.msra.mxu0 0
  %1047 = vmatpush.bf16.msra.mxu0 0
  %1048 = vmatpush.bf16.msra.mxu0 0
  %1049 = vmatpush.bf16.msra.mxu0 %v744
  %1050 = vmatpush.bf16.msra.mxu0 %v743
  %1051 = vmatmul.bf16.gmra.mxu0 %v1041
  %v1052 = vpop.f32.mrf.mxu0
  %v1053 = vadd.f32 0.0, %v1052
  %v1054 = vpop.f32.mrf.mxu0
  %1055 = vdwg.mxu0
  %v1056 = vadd.f32 %v1038, %v1053
  %v1057 = vxor.u32 %v1056, 2147483648
  %v1058 = vmul.f32 %v1057, 1.442695
  %v1059 = vpow.pop %v1058
  %v1060 = vadd.f32 %v1059, 1.0
  %v1061 = vrcp.pop %v1060
  %v1062 = vmul.f32 %v1060, %v1061
  %v1063 = vsub.f32 1.0, %v1062
  %v1064 = vmul.f32 %v1061, %v1063
  %v1065 = vadd.f32 %v1061, %v1064
  %vm1066 = vweird.f32 %v1060
  %vm1067 = vweird.f32 %v1061
  %vm1068 = vmor %vm1066, %vm1067
  %v1069 = vsel %vm1068, %v1061, %v1065
  %v1070 = vand.u32 2147483647, %v1060
  %vm1071 = vcmp.eq.f32.partialorder %v1070, 8.507059e+37
  %v1072 = vand.u32 %v1060, 2147483648
  %v1073 = vor.u32 1.1754944e-38, %v1072
  %v1074 = vsel %vm1071, %v1073, %v1069
  %v1075 = vmul.f32 1.0, %v1074
  %v1076 = vtanh.pop %v1056
  %1078 = vrot.lane.b32.xlu0 %v1037, 32
  %v1079 = vpop.permute.xlu0 %1078
  %v1081 = vmul.f32 %v1075, %v1079
  %1083 = vrot.lane.b32.xlu0 %v1076, 64
  %v1084 = vpop.permute.xlu0 %1083
  %v1086 = vmul.f32 %v1075, %v1084
  %1088 = vrot.lane.b32.xlu0 %v1086, 32
  %v1089 = vpop.permute.xlu0 %1088
  %v1091 = vadd.f32 %v1081, %v1089
  %v1092 = vtanh.pop %v1091
  %1094 = vrot.lane.b32.xlu0 %v1092, 64
  %v1095 = vpop.permute.xlu0 %1094
  %v1097 = vmul.f32 %v1075, %v1095
  %1099 = vrot.lane.b32.xlu0 %v1097, 32
  %v1100 = vpop.permute.xlu0 %1099
  %1102 = vst.msk [vmem:[#allocation4] sm:$0x3] %vm69, %v1100
  %1104 = vrot.lane.b32.xlu0 %v1091, 96
  %v1105 = vpop.permute.xlu0 %1104
  %1107 = vst.msk [vmem:[#allocation5] sm:$0x3] %vm69, %v1105
  %1108 = vst.msk [vmem:[#allocation6 + $0x3] sm:$0x2] %vm815, %v1100
  %v1109 = vld [vmem:[#allocation4] sm:$0x3]
  %v1110 = vld [vmem:[#allocation5] sm:$0x3]
  %v1111 = vld [vmem:[%s460] sm:$0x3]
  %v1112 = vpack.c.bf16 %v1109, %v1109
  %v1114 = vsel %vm88, %v1112, 0
  %1116 = vmatpush.bf16.msra.mxu0 0
  %1117 = vmatpush.bf16.msra.mxu0 0
  %1118 = vmatpush.bf16.msra.mxu0 0
  %1119 = vmatpush.bf16.msra.mxu0 0
  %1120 = vmatpush.bf16.msra.mxu0 0
  %1121 = vmatpush.bf16.msra.mxu0 0
  %1122 = vmatpush.bf16.msra.mxu0 %v744
  %1123 = vmatpush.bf16.msra.mxu0 %v743
  %1124 = vmatmul.bf16.gmra.mxu0 %v1114
  %v1125 = vpop.f32.mrf.mxu0
  %v1126 = vadd.f32 0.0, %v1125
  %v1127 = vpop.f32.mrf.mxu0
  %1128 = vdwg.mxu0
  %v1129 = vadd.f32 %v1111, %v1126
  %v1130 = vxor.u32 %v1129, 2147483648
  %v1131 = vmul.f32 %v1130, 1.442695
  %v1132 = vpow.pop %v1131
  %v1133 = vadd.f32 %v1132, 1.0
  %v1134 = vrcp.pop %v1133
  %v1135 = vmul.f32 %v1133, %v1134
  %v1136 = vsub.f32 1.0, %v1135
  %v1137 = vmul.f32 %v1134, %v1136
  %v1138 = vadd.f32 %v1134, %v1137
  %vm1139 = vweird.f32 %v1133
  %vm1140 = vweird.f32 %v1134
  %vm1141 = vmor %vm1139, %vm1140
  %v1142 = vsel %vm1141, %v1134, %v1138
  %v1143 = vand.u32 2147483647, %v1133
  %vm1144 = vcmp.eq.f32.partialorder %v1143, 8.507059e+37
  %v1145 = vand.u32 %v1133, 2147483648
  %v1146 = vor.u32 1.1754944e-38, %v1145
  %v1147 = vsel %vm1144, %v1146, %v1142
  %v1148 = vmul.f32 1.0, %v1147
  %v1149 = vtanh.pop %v1129
  %1151 = vrot.lane.b32.xlu0 %v1110, 32
  %v1152 = vpop.permute.xlu0 %1151
  %v1154 = vmul.f32 %v1148, %v1152
  %1156 = vrot.lane.b32.xlu0 %v1149, 64
  %v1157 = vpop.permute.xlu0 %1156
  %v1159 = vmul.f32 %v1148, %v1157
  %1161 = vrot.lane.b32.xlu0 %v1159, 32
  %v1162 = vpop.permute.xlu0 %1161
  %v1164 = vadd.f32 %v1154, %v1162
  %v1165 = vtanh.pop %v1164
  %1167 = vrot.lane.b32.xlu0 %v1165, 64
  %v1168 = vpop.permute.xlu0 %1167
  %v1170 = vmul.f32 %v1148, %v1168
  %1172 = vrot.lane.b32.xlu0 %v1170, 32
  %v1173 = vpop.permute.xlu0 %1172
  %1175 = vst.msk [vmem:[#allocation4] sm:$0x3] %vm69, %v1173
  %1177 = vrot.lane.b32.xlu0 %v1164, 96
  %v1178 = vpop.permute.xlu0 %1177
  %1180 = vst.msk [vmem:[#allocation5] sm:$0x3] %vm69, %v1178
  %1181 = vst.msk [vmem:[#allocation6 + $0x4] sm:$0x2] %vm815, %v1173
  %v1182 = vld [vmem:[#allocation4] sm:$0x3]
  %v1183 = vld [vmem:[#allocation5] sm:$0x3]
  %v1184 = vld [vmem:[%s535] sm:$0x3]
  %v1185 = vpack.c.bf16 %v1182, %v1182
  %v1187 = vsel %vm88, %v1185, 0
  %1189 = vmatpush.bf16.msra.mxu0 0
  %1190 = vmatpush.bf16.msra.mxu0 0
  %1191 = vmatpush.bf16.msra.mxu0 0
  %1192 = vmatpush.bf16.msra.mxu0 0
  %1193 = vmatpush.bf16.msra.mxu0 0
  %1194 = vmatpush.bf16.msra.mxu0 0
  %1195 = vmatpush.bf16.msra.mxu0 %v744
  %1196 = vmatpush.bf16.msra.mxu0 %v743
  %1197 = vmatmul.bf16.gmra.mxu0 %v1187
  %v1198 = vpop.f32.mrf.mxu0
  %v1199 = vadd.f32 0.0, %v1198
  %v1200 = vpop.f32.mrf.mxu0
  %1201 = vdwg.mxu0
  %v1202 = vadd.f32 %v1184, %v1199
  %v1203 = vxor.u32 %v1202, 2147483648
  %v1204 = vmul.f32 %v1203, 1.442695
  %v1205 = vpow.pop %v1204
  %v1206 = vadd.f32 %v1205, 1.0
  %v1207 = vrcp.pop %v1206
  %v1208 = vmul.f32 %v1206, %v1207
  %v1209 = vsub.f32 1.0, %v1208
  %v1210 = vmul.f32 %v1207, %v1209
  %v1211 = vadd.f32 %v1207, %v1210
  %vm1212 = vweird.f32 %v1206
  %vm1213 = vweird.f32 %v1207
  %vm1214 = vmor %vm1212, %vm1213
  %v1215 = vsel %vm1214, %v1207, %v1211
  %v1216 = vand.u32 2147483647, %v1206
  %vm1217 = vcmp.eq.f32.partialorder %v1216, 8.507059e+37
  %v1218 = vand.u32 %v1206, 2147483648
  %v1219 = vor.u32 1.1754944e-38, %v1218
  %v1220 = vsel %vm1217, %v1219, %v1215
  %v1221 = vmul.f32 1.0, %v1220
  %v1222 = vtanh.pop %v1202
  %1224 = vrot.lane.b32.xlu0 %v1183, 32
  %v1225 = vpop.permute.xlu0 %1224
  %v1227 = vmul.f32 %v1221, %v1225
  %1229 = vrot.lane.b32.xlu0 %v1222, 64
  %v1230 = vpop.permute.xlu0 %1229
  %v1232 = vmul.f32 %v1221, %v1230
  %1234 = vrot.lane.b32.xlu0 %v1232, 32
  %v1235 = vpop.permute.xlu0 %1234
  %v1237 = vadd.f32 %v1227, %v1235
  %v1238 = vtanh.pop %v1237
  %1240 = vrot.lane.b32.xlu0 %v1238, 64
  %v1241 = vpop.permute.xlu0 %1240
  %v1243 = vmul.f32 %v1221, %v1241
  %1245 = vrot.lane.b32.xlu0 %v1243, 32
  %v1246 = vpop.permute.xlu0 %1245
  %1248 = vst.msk [vmem:[#allocation4] sm:$0x3] %vm69, %v1246
  %1250 = vrot.lane.b32.xlu0 %v1237, 96
  %v1251 = vpop.permute.xlu0 %1250
  %1253 = vst.msk [vmem:[#allocation5] sm:$0x3] %vm69, %v1251
  %1254 = vst.msk [vmem:[#allocation6 + $0x5] sm:$0x2] %vm815, %v1246
  %v1255 = vld [vmem:[#allocation4] sm:$0x3]
  %v1256 = vld [vmem:[#allocation5] sm:$0x3]
  %v1257 = vld [vmem:[%s610] sm:$0x3]
  %v1258 = vpack.c.bf16 %v1255, %v1255
  %v1260 = vsel %vm88, %v1258, 0
  %1262 = vmatpush.bf16.msra.mxu0 0
  %1263 = vmatpush.bf16.msra.mxu0 0
  %1264 = vmatpush.bf16.msra.mxu0 0
  %1265 = vmatpush.bf16.msra.mxu0 0
  %1266 = vmatpush.bf16.msra.mxu0 0
  %1267 = vmatpush.bf16.msra.mxu0 0
  %1268 = vmatpush.bf16.msra.mxu0 %v744
  %1269 = vmatpush.bf16.msra.mxu0 %v743
  %1270 = vmatmul.bf16.gmra.mxu0 %v1260
  %v1271 = vpop.f32.mrf.mxu0
  %v1272 = vadd.f32 0.0, %v1271
  %v1273 = vpop.f32.mrf.mxu0
  %1274 = vdwg.mxu0
  %v1275 = vadd.f32 %v1257, %v1272
  %v1276 = vxor.u32 %v1275, 2147483648
  %v1277 = vmul.f32 %v1276, 1.442695
  %v1278 = vpow.pop %v1277
  %v1279 = vadd.f32 %v1278, 1.0
  %v1280 = vrcp.pop %v1279
  %v1281 = vmul.f32 %v1279, %v1280
  %v1282 = vsub.f32 1.0, %v1281
  %v1283 = vmul.f32 %v1280, %v1282
  %v1284 = vadd.f32 %v1280, %v1283
  %vm1285 = vweird.f32 %v1279
  %vm1286 = vweird.f32 %v1280
  %vm1287 = vmor %vm1285, %vm1286
  %v1288 = vsel %vm1287, %v1280, %v1284
  %v1289 = vand.u32 2147483647, %v1279
  %vm1290 = vcmp.eq.f32.partialorder %v1289, 8.507059e+37
  %v1291 = vand.u32 %v1279, 2147483648
  %v1292 = vor.u32 1.1754944e-38, %v1291
  %v1293 = vsel %vm1290, %v1292, %v1288
  %v1294 = vmul.f32 1.0, %v1293
  %v1295 = vtanh.pop %v1275
  %1297 = vrot.lane.b32.xlu0 %v1256, 32
  %v1298 = vpop.permute.xlu0 %1297
  %v1300 = vmul.f32 %v1294, %v1298
  %1302 = vrot.lane.b32.xlu0 %v1295, 64
  %v1303 = vpop.permute.xlu0 %1302
  %v1305 = vmul.f32 %v1294, %v1303
  %1307 = vrot.lane.b32.xlu0 %v1305, 32
  %v1308 = vpop.permute.xlu0 %1307
  %v1310 = vadd.f32 %v1300, %v1308
  %v1311 = vtanh.pop %v1310
  %1313 = vrot.lane.b32.xlu0 %v1311, 64
  %v1314 = vpop.permute.xlu0 %1313
  %v1316 = vmul.f32 %v1294, %v1314
  %1318 = vrot.lane.b32.xlu0 %v1316, 32
  %v1319 = vpop.permute.xlu0 %1318
  %1321 = vst.msk [vmem:[#allocation4] sm:$0x3] %vm69, %v1319
  %1323 = vrot.lane.b32.xlu0 %v1310, 96
  %v1324 = vpop.permute.xlu0 %1323
  %1326 = vst.msk [vmem:[#allocation5] sm:$0x3] %vm69, %v1324
  %1327 = vst.msk [vmem:[#allocation6 + $0x6] sm:$0x2] %vm815, %v1319
  %v1328 = vld [vmem:[#allocation6] sm:$0xff]
  %v1329 = vld [vmem:[%s7] sm:$0xff]
  %v1330 = vld [vmem:[%s7 + $0x8] sm:$0xff]
  %v1331 = vld [vmem:[%s7 + $0x10] sm:$0xff]
  %v1332 = vld [vmem:[%s7 + $0x18] sm:$0xff]
  %v1333 = vld [vmem:[%s8] sm:$0x1]
  %v1335 = vperm.slane %v1333, 0
  %v1338 = vsel %vm88, %v1328, 0
  %1340 = vmatpush.msra.mxu0 0.0
  %1341 = vmatpush.msra.mxu0 0.0
  %1342 = vmatpush.msra.mxu0 0.0
  %1343 = vmatpush.msra.mxu0 0.0
  %1344 = vmatpush.msra.mxu0 0.0
  %1345 = vmatpush.msra.mxu0 0.0
  %1346 = vmatpush.msra.mxu0 0.0
  %1347 = vmatpush.msra.mxu0 0.0
  %1348 = vmatpush.msra.mxu0 0.0
  %1349 = vmatpush.msra.mxu0 0.0
  %1350 = vmatpush.msra.mxu0 0.0
  %1351 = vmatpush.msra.mxu0 0.0
  %1352 = vmatpush.msra.mxu0 %v1332
  %1353 = vmatpush.msra.mxu0 %v1331
  %1354 = vmatpush.msra.mxu0 %v1330
  %1355 = vmatpush.msra.mxu0 %v1329
  %1356 = vmatmul.f32.gmra.mxu0 %v1338
  %v1357 = vpop.f32.mrf.mxu0
  %v1358 = vadd.f32 %v1335, %v1357
  %1359 = vdwg.mxu0
  %v1360 = vxor.u32 %v1358, 2147483648
  %v1361 = vmul.f32 %v1360, 1.442695
  %v1362 = vpow.pop %v1361
  %v1363 = vadd.f32 %v1362, 1.0
  %v1364 = vrcp.pop %v1363
  %v1365 = vmul.f32 %v1363, %v1364
  %v1366 = vsub.f32 1.0, %v1365
  %v1367 = vmul.f32 %v1364, %v1366
  %v1368 = vadd.f32 %v1364, %v1367
  %vm1369 = vweird.f32 %v1363
  %vm1370 = vweird.f32 %v1364
  %vm1371 = vmor %vm1369, %vm1370
  %v1372 = vsel %vm1371, %v1364, %v1368
  %v1373 = vand.u32 2147483647, %v1363
  %vm1374 = vcmp.eq.f32.partialorder %v1373, 8.507059e+37
  %v1375 = vand.u32 %v1363, 2147483648
  %v1376 = vor.u32 1.1754944e-38, %v1375
  %v1377 = vsel %vm1374, %v1376, %v1372
  %v1378 = vmul.f32 1.0, %v1377
  %vm1379 = vcmask 15360
  %1380 = vst.msk [vmem:[%s9] sm:$0xff] %vm1379, %v1378
  // Predicated region
  $region38: #{lstm_module_forward.1} parent=0 // pred_check
    _
  $region39: #{lstm_module_forward.1} parent=0 // pred_check_branch
    %1382 = sbr.rel (0) target = $region41
  $region40: #{lstm_module_forward.1} parent=0 // pred_region
    _
  $region41: #{lstm_module_forward.1} parent=0 // pred_fallthru
    _
  // Predicated region
  $region42: #{lstm_module_forward.1} parent=0 // pred_check
    _
  $region43: #{lstm_module_forward.1} parent=0 // pred_check_branch
    %1384 = sbr.rel (0) target = $region45
  $region44: #{lstm_module_forward.1} parent=0 // pred_region
    _
  $region45: #{lstm_module_forward.1} parent=0 // pred_fallthru
    _

</llo_original>
